<compile_context>
chip_gen: v7x
topology: tpu7x:2x2x1
jax: 0.10.0
libtpu: 0.0.40
codegen_flags: <defaults>
</compile_context>

<pallas_src>
import functools
import math

import jax
import jax.numpy as jnp
from jax import lax
from jax.experimental import pallas as pl
from jax.experimental.pallas import tpu as pltpu


# ---------------------------------------------------------------------------
# in-kernel helpers (operate on VMEM-resident values, all elementwise in f32)
# ---------------------------------------------------------------------------
def _silu(x):
    return x * jax.nn.sigmoid(x)


def _rmsnorm(x, w, eps):
    ms = jnp.mean(x * x, axis=-1, keepdims=True)
    return x * lax.rsqrt(ms + eps) * w


def _softplus(v):
    # log1p-based, stable for both tails
    return jnp.where(v > 20.0, v, jnp.log1p(jnp.exp(jnp.minimum(v, 20.0))))


def _mm(x, w, b=None):
    # (M, K) @ (K, N) on the MXU, bf16 operands, f32 accumulate.
    y = jnp.dot(x.astype(jnp.bfloat16), w.astype(jnp.bfloat16),
                preferred_element_type=jnp.float32)
    if b is not None:
        y = y + b
    return y


WEIGHT_NAMES = ("norm1_w", "norm2_w", "in_proj_w", "conv_w", "conv_b",
                "A_log", "dt_bias", "D_rep", "mnorm_w", "out_proj_w",
                "mlp_w1", "mlp_b1", "mlp_w2", "mlp_b2")


# ---------------------------------------------------------------------------
# per-(sequence, block) kernel body
# ---------------------------------------------------------------------------
def _mpts_block_kernel(h0_ref, n1w, n2w, win, wconv, bconv, alog, dtb, dexp,
                       mnw, wout, w1, b1, w2, b2, o_ref, *,
                       L, d_inner, d_state, nheads, headdim, d_conv):
    N, H, P, K = d_state, nheads, headdim, d_conv
    conv_dim = d_inner + 2 * N
    blk = pl.program_id(1)

    # Residual stream carried across the block axis in the VMEM-resident
    # output block (same output block index for every b -> no HBM roundtrip).
    @pl.when(blk == 0)
    def _():
        o_ref[...] = h0_ref[...]

    h = o_ref[...]                                               # (L, Dm) f32

    # ==================== token mixer: RMSNorm -> Mamba2 ====================
    h1 = _rmsnorm(h, n1w[...], 1e-6)
    zxbcdt = _mm(h1, win[...])                                   # (L, 2*di+2*N+H)
    z = zxbcdt[:, :d_inner]
    xBC = zxbcdt[:, d_inner:d_inner + conv_dim]
    dt_raw = zxbcdt[:, d_inner + conv_dim:]

    # depthwise causal conv1d + SiLU (value-level left shifts, no scratch)
    acc = bconv[...] + wconv[K - 1:K, :] * xBC                   # k = K-1 (shift 0)
    for k in range(K - 1):                                       # static unroll
        d = K - 1 - k
        shifted = jnp.concatenate(
            [jnp.zeros((d, conv_dim), jnp.float32), xBC[:L - d, :]], axis=0)
        acc = acc + wconv[k:k + 1, :] * shifted
    xBC = _silu(acc)                                             # (L, conv_dim)

    xs = xBC[:, :d_inner]                                        # (L, d_inner)
    Bm = xBC[:, d_inner:d_inner + N]                             # (L, N)
    Cm = xBC[:, d_inner + N:]                                    # (L, N)

    # --- SSD selective scan, exact single-chunk quadratic form ---
    #   y[t] = sum_{s<=t} (C_t . B_s) * exp(cum[t]-cum[s]) * dt_s * x_s + D*x_t
    # TODO(synk): for long sequences, chunk this (carry per-head (P,N) state)
    #             to bound the O(L^2) VMEM / EUP-exp cost.
    dt = _softplus(dt_raw + dtb[...])                            # (L, H)
    da = dt * (-jnp.exp(alog[...]))                              # (L, H)

    r = lax.broadcasted_iota(jnp.int32, (L, L), 0)
    c = lax.broadcasted_iota(jnp.int32, (L, L), 1)
    tril = (r >= c).astype(jnp.float32)                          # [t, s]: s <= t

    cum = jnp.dot(tril, da, preferred_element_type=jnp.float32)  # (L, H) incl. cumsum (f32)
    cumT = jnp.swapaxes(cum, 0, 1)                               # (H, L) XLU transpose

    CB = jnp.dot(Cm.astype(jnp.bfloat16), Bm.T.astype(jnp.bfloat16),
                 preferred_element_type=jnp.float32)             # (L, L)

    ys = []
    for hh in range(H):                                          # static unroll
        expo = cum[:, hh:hh + 1] - cumT[hh:hh + 1, :]            # (L, L)
        decay = tril * jnp.exp(jnp.minimum(expo, 0.0))           # masked, <= 1, f32
        Mh = (CB * decay).astype(jnp.bfloat16)
        u = (dt[:, hh:hh + 1] * xs[:, hh * P:(hh + 1) * P]).astype(jnp.bfloat16)
        ys.append(jnp.dot(Mh, u, preferred_element_type=jnp.float32))
    y = jnp.concatenate(ys, axis=-1) + xs * dexp[...]            # (L, d_inner), one value

    # gated RMSNorm (norm_before_gate=False) + out_proj (no bias) + residual
    g = _rmsnorm(y * _silu(z), mnw[...], 1e-5)
    h = h + _mm(g, wout[...])

    # ==================== channel mixer: RMSNorm -> MLP =====================
    h2 = _rmsnorm(h, n2w[...], 1e-6)
    m = _silu(_mm(h2, w1[...], b1[...]))
    h = h + _mm(m, w2[...], b2[...])

    o_ref[...] = h


# ---------------------------------------------------------------------------
# wrapper: XLA does the lane-sparse 2<->d_model ends, Pallas does the blocks
# ---------------------------------------------------------------------------
def mpts_forward(x, params, cfg):
    B, Lx, _ = x.shape
    L = Lx + 1                                    # sos token prepended
    Dm = cfg["d_model"]
    d_inner = cfg["d_inner"]
    N = cfg["d_state"]
    H = cfg["nheads"]
    P = cfg["headdim"]
    K = cfg["d_conv"]
    hid = cfg["mlp_hidden"]
    nb = cfg["num_blocks"]
    conv_dim = d_inner + 2 * N
    d_in_proj = 2 * d_inner + 2 * N + H

    # lane-sparse 2 -> d_model projection + sos concat: trivially cheap in XLA
    proj = jnp.einsum("bli,id->bld", x, params["inproj_w"]) + params["inproj_b"]
    sos = jnp.broadcast_to(params["sos"], (B, 1, Dm))
    h0 = jnp.concatenate([sos, proj], axis=1).astype(jnp.float32)   # (B, L, Dm)

    weights = [params["stacked"][n] for n in WEIGHT_NAMES]

    def wspec(a):
        rest = a.ndim - 1
        return pl.BlockSpec((None,) + a.shape[1:],
                            lambda i, b, _r=rest: (b,) + (0,) * _r)

    in_specs = [pl.BlockSpec((None, L, Dm), lambda i, b: (i, 0, 0))]
    in_specs += [wspec(a) for a in weights]
    out_spec = pl.BlockSpec((None, L, Dm), lambda i, b: (i, 0, 0))

    # VMEM budget: double-buffered per-step blocks + resident output + activations
    resident = 2 * L * Dm * 4
    for a in weights + [h0]:
        resident += 2 * math.prod(a.shape[1:]) * a.dtype.itemsize
    act = 4 * (L * (d_in_proj + 3 * conv_dim + 4 * d_inner + hid + 6 * Dm)
               + 6 * L * L)
    vmem_limit = int(max(16 << 20, min(resident + 4 * act + (4 << 20), 56 << 20)))

    kern = functools.partial(
        _mpts_block_kernel, L=L, d_inner=d_inner, d_state=N,
        nheads=H, headdim=P, d_conv=K)

    h_out = pl.pallas_call(
        kern,
        out_shape=jax.ShapeDtypeStruct((B, L, Dm), jnp.float32),
        grid=(B, nb),
        in_specs=in_specs,
        out_specs=out_spec,
        compiler_params=pltpu.CompilerParams(
            dimension_semantics=("parallel", "arbitrary"),
            vmem_limit_bytes=vmem_limit),
    )(h0, *weights)

    # lane-sparse d_model -> 2 projection outside the kernel (bias=False)
    return jnp.einsum("bld,do->blo", h_out, params["outproj_w"])


# ---------------------------------------------------------------------------
# deterministic synthetic parameters (shapes follow the PyTorch module);
# per-block weights are stacked along a leading num_blocks dim for streaming.
# ---------------------------------------------------------------------------
def init_params(key, cfg):
    Dm, d_inner, N = cfg["d_model"], cfg["d_inner"], cfg["d_state"]
    H, P, K = cfg["nheads"], cfg["headdim"], cfg["d_conv"]
    hid, nb = cfg["mlp_hidden"], cfg["num_blocks"]
    conv_dim = d_inner + 2 * N
    d_in_proj = 2 * d_inner + 2 * N + H

    keys = iter(jax.random.split(key, 12))

    def nrm(shape, scale=0.02):
        return scale * jax.random.normal(next(keys), shape, jnp.float32)

    # Mamba2-style init for dt_bias / A_log
    dtv = jnp.exp(jax.random.uniform(next(keys), (nb, H))
                  * (jnp.log(0.1) - jnp.log(0.001)) + jnp.log(0.001))
    dtv = jnp.maximum(dtv, 1e-4)
    dt_bias = (dtv + jnp.log(-jnp.expm1(-dtv))).reshape(nb, 1, H)   # inv softplus
    A_log = jnp.log(jax.random.uniform(next(keys), (nb, H),
                                       minval=1.0, maxval=16.0)).reshape(nb, 1, H)

    stacked = dict(
        norm1_w=jnp.ones((nb, 1, Dm), jnp.float32),
        norm2_w=jnp.ones((nb, 1, Dm), jnp.float32),
        in_proj_w=nrm((nb, Dm, d_in_proj)),
        conv_w=nrm((nb, K, conv_dim), 0.2),
        conv_b=jnp.zeros((nb, 1, conv_dim), jnp.float32),
        A_log=A_log.astype(jnp.float32),
        dt_bias=dt_bias.astype(jnp.float32),
        D_rep=jnp.ones((nb, 1, d_inner), jnp.float32),   # D expanded over headdim
        mnorm_w=jnp.ones((nb, 1, d_inner), jnp.float32),
        out_proj_w=nrm((nb, d_inner, Dm)),               # out_proj bias=False
        mlp_w1=nrm((nb, Dm, hid)),
        mlp_b1=jnp.zeros((nb, 1, hid), jnp.float32),
        mlp_w2=nrm((nb, hid, Dm)),
        mlp_b2=jnp.zeros((nb, 1, Dm), jnp.float32),
    )
    return dict(
        inproj_w=nrm((2, Dm)), inproj_b=jnp.zeros((1, Dm), jnp.float32),
        sos=jnp.zeros((1, 1, Dm), jnp.float32),
        outproj_w=nrm((Dm, 2)),
        stacked=stacked,
    )


if __name__ == "__main__":
    cfg = dict(d_model=32, d_state=32, d_conv=4, expand=2, headdim=16,
               num_blocks=2)
    cfg["d_inner"] = cfg["expand"] * cfg["d_model"]
    cfg["nheads"] = cfg["d_inner"] // cfg["headdim"]
    cfg["mlp_hidden"] = 4 * cfg["d_model"]

    key = jax.random.PRNGKey(0)
    kp, kx = jax.random.split(key)
    params = init_params(kp, cfg)

    # input: (batch=2, seq=8, features=2) — inproj maps 2 -> d_model
    x = jax.random.normal(kx, (2, 8, 2), jnp.float32)

    out = jax.block_until_ready(mpts_forward(x, params, cfg))
    assert out.shape == (2, 9, 2), out.shape          # sos token prepended
    assert bool(jnp.all(jnp.isfinite(out)))
    print("KERNEL_OK")
</pallas_src>

<mosaic_0001>
module attributes {stable_mosaic.version = 11 : i64} {
  func.func @_mpts_block_kernel(%arg0: i32, %arg1: i32, %arg2: memref<1x9x32xf32, #tpu.memory_space<vmem>>, %arg3: memref<1x1x32xf32, #tpu.memory_space<vmem>>, %arg4: memref<1x1x32xf32, #tpu.memory_space<vmem>>, %arg5: memref<1x32x196xf32, #tpu.memory_space<vmem>>, %arg6: memref<1x4x128xf32, #tpu.memory_space<vmem>>, %arg7: memref<1x1x128xf32, #tpu.memory_space<vmem>>, %arg8: memref<1x1x4xf32, #tpu.memory_space<vmem>>, %arg9: memref<1x1x4xf32, #tpu.memory_space<vmem>>, %arg10: memref<1x1x64xf32, #tpu.memory_space<vmem>>, %arg11: memref<1x1x64xf32, #tpu.memory_space<vmem>>, %arg12: memref<1x64x32xf32, #tpu.memory_space<vmem>>, %arg13: memref<1x32x128xf32, #tpu.memory_space<vmem>>, %arg14: memref<1x1x128xf32, #tpu.memory_space<vmem>>, %arg15: memref<1x128x32xf32, #tpu.memory_space<vmem>>, %arg16: memref<1x1x32xf32, #tpu.memory_space<vmem>>, %arg17: memref<1x9x32xf32, #tpu.memory_space<vmem>>) attributes {dimension_semantics = [#tpu.dimension_semantics<parallel>, #tpu.dimension_semantics<arbitrary>], iteration_bounds = array<i64: 2, 2>, scalar_prefetch = 0 : i64, scratch_operands = 0 : i64, tpu.core_type = #tpu.core_type<tc>, window_params = [{transform_indices = @transform_0, window_bounds = array<i64: 1, 9, 32>}, {transform_indices = @transform_1, window_bounds = array<i64: 1, 1, 32>}, {transform_indices = @transform_2, window_bounds = array<i64: 1, 1, 32>}, {transform_indices = @transform_3, window_bounds = array<i64: 1, 32, 196>}, {transform_indices = @transform_4, window_bounds = array<i64: 1, 4, 128>}, {transform_indices = @transform_5, window_bounds = array<i64: 1, 1, 128>}, {transform_indices = @transform_6, window_bounds = array<i64: 1, 1, 4>}, {transform_indices = @transform_7, window_bounds = array<i64: 1, 1, 4>}, {transform_indices = @transform_8, window_bounds = array<i64: 1, 1, 64>}, {transform_indices = @transform_9, window_bounds = array<i64: 1, 1, 64>}, {transform_indices = @transform_10, window_bounds = array<i64: 1, 64, 32>}, {transform_indices = @transform_11, window_bounds = array<i64: 1, 32, 128>}, {transform_indices = @transform_12, window_bounds = array<i64: 1, 1, 128>}, {transform_indices = @transform_13, window_bounds = array<i64: 1, 128, 32>}, {transform_indices = @transform_14, window_bounds = array<i64: 1, 1, 32>}, {transform_indices = @transform_15, window_bounds = array<i64: 1, 9, 32>}]} {
    %c0_i32 = arith.constant 0 : i32
    %0 = arith.cmpi eq, %arg1, %c0_i32 : i32
    %1 = arith.extui %0 : i1 to i32
    %c0_i32_0 = arith.constant 0 : i32
    %2 = arith.cmpi ne, %1, %c0_i32_0 : i32
    scf.if %2 {
      %c0_85 = arith.constant 0 : index
      %c0_86 = arith.constant 0 : index
      %c0_87 = arith.constant 0 : index
      %240 = vector.load %arg2[%c0_85, %c0_86, %c0_87] : memref<1x9x32xf32, #tpu.memory_space<vmem>>, vector<1x9x32xf32>
      %241 = vector.shape_cast %240 : vector<1x9x32xf32> to vector<9x32xf32>
      %c0_88 = arith.constant 0 : index
      %c0_89 = arith.constant 0 : index
      %c0_90 = arith.constant 0 : index
      %242 = vector.load %arg17[%c0_88, %c0_89, %c0_90] : memref<1x9x32xf32, #tpu.memory_space<vmem>>, vector<1x9x32xf32>
      %243 = vector.shape_cast %242 : vector<1x9x32xf32> to vector<9x32xf32>
      %244 = vector.shape_cast %241 : vector<9x32xf32> to vector<1x9x32xf32>
      tpu.vector_store %arg17[%c0_88, %c0_89, %c0_90], %244 {strides = array<i32>} : memref<1x9x32xf32, #tpu.memory_space<vmem>>, vector<1x9x32xf32>,
    } else {
    }
    %c0 = arith.constant 0 : index
    %c0_1 = arith.constant 0 : index
    %c0_2 = arith.constant 0 : index
    %3 = vector.load %arg17[%c0, %c0_1, %c0_2] : memref<1x9x32xf32, #tpu.memory_space<vmem>>, vector<1x9x32xf32>
    %4 = vector.shape_cast %3 : vector<1x9x32xf32> to vector<9x32xf32>
    %c0_3 = arith.constant 0 : index
    %c0_4 = arith.constant 0 : index
    %c0_5 = arith.constant 0 : index
    %5 = vector.load %arg3[%c0_3, %c0_4, %c0_5] : memref<1x1x32xf32, #tpu.memory_space<vmem>>, vector<1x1x32xf32>
    %6 = vector.shape_cast %5 : vector<1x1x32xf32> to vector<1x32xf32>
    %7 = arith.mulf %4, %4 : vector<9x32xf32>
    %cst = arith.constant dense<0.000000e+00> : vector<9xf32>
    %8 = vector.multi_reduction <add>, %7, %cst [1] : vector<9x32xf32> to vector<9xf32>
    %9 = vector.shape_cast %8 : vector<9xf32> to vector<9x1xf32>
    %cst_6 = arith.constant 3.200000e+01 : f32
    %10 = vector.broadcast %cst_6 : f32 to vector<9x1xf32>
    %11 = arith.divf %9, %10 : vector<9x1xf32>
    %cst_7 = arith.constant 9.99999997E-7 : f32
    %12 = vector.broadcast %cst_7 : f32 to vector<9x1xf32>
    %13 = arith.addf %11, %12 : vector<9x1xf32>
    %14 = math.rsqrt %13 : vector<9x1xf32>
    %15 = vector.broadcast %14 : vector<9x1xf32> to vector<9x32xf32>
    %16 = arith.mulf %4, %15 : vector<9x32xf32>
    %17 = vector.broadcast %6 : vector<1x32xf32> to vector<9x32xf32>
    %18 = arith.mulf %16, %17 : vector<9x32xf32>
    %c0_8 = arith.constant 0 : index
    %c0_9 = arith.constant 0 : index
    %c0_10 = arith.constant 0 : index
    %19 = vector.load %arg5[%c0_8, %c0_9, %c0_10] : memref<1x32x196xf32, #tpu.memory_space<vmem>>, vector<1x32x196xf32>
    %20 = vector.shape_cast %19 : vector<1x32x196xf32> to vector<32x196xf32>
    %21 = arith.truncf %18 : vector<9x32xf32> to vector<9x32xbf16>
    %22 = arith.truncf %20 : vector<32x196xf32> to vector<32x196xbf16>
    %cst_11 = arith.constant dense<0.000000e+00> : vector<9x196xf32>
    %23 = tpu.matmul %21, %22, %cst_11 {dimension_numbers = #tpu.dot_dimension_numbers<[1], [0], [0], [1], [0, 0, 1, 1], [], []>} : vector<9x32xbf16>, vector<32x196xbf16>, vector<9x196xf32> -> vector<9x196xf32>
    %24 = vector.extract_strided_slice %23 {offsets = [0, 0], sizes = [9, 64], strides = [1, 1]} : vector<9x196xf32> to vector<9x64xf32>
    %25 = vector.extract_strided_slice %23 {offsets = [0, 64], sizes = [9, 128], strides = [1, 1]} : vector<9x196xf32> to vector<9x128xf32>
    %26 = vector.extract_strided_slice %23 {offsets = [0, 192], sizes = [9, 4], strides = [1, 1]} : vector<9x196xf32> to vector<9x4xf32>
    %c0_12 = arith.constant 0 : index
    %c0_13 = arith.constant 0 : index
    %c0_14 = arith.constant 0 : index
    %27 = vector.load %arg7[%c0_12, %c0_13, %c0_14] : memref<1x1x128xf32, #tpu.memory_space<vmem>>, vector<1x1x128xf32>
    %28 = vector.shape_cast %27 : vector<1x1x128xf32> to vector<1x128xf32>
    %c0_15 = arith.constant 0 : index
    %c3 = arith.constant 3 : index
    %c0_16 = arith.constant 0 : index
    %29 = vector.load %arg6[%c0_15, %c3, %c0_16] : memref<1x4x128xf32, #tpu.memory_space<vmem>>, vector<1x1x128xf32>
    %30 = vector.shape_cast %29 : vector<1x1x128xf32> to vector<1x128xf32>
    %31 = vector.broadcast %30 : vector<1x128xf32> to vector<9x128xf32>
    %32 = arith.mulf %31, %25 : vector<9x128xf32>
    %33 = vector.broadcast %28 : vector<1x128xf32> to vector<9x128xf32>
    %34 = arith.addf %33, %32 : vector<9x128xf32>
    %cst_17 = arith.constant 0.000000e+00 : f32
    %35 = vector.broadcast %cst_17 : f32 to vector<3x128xf32>
    %36 = vector.extract_strided_slice %25 {offsets = [0, 0], sizes = [6, 128], strides = [1, 1]} : vector<9x128xf32> to vector<6x128xf32>
    %37 = tpu.concatenate %35, %36 in 0 : vector<3x128xf32>, vector<6x128xf32> -> vector<9x128xf32>
    %c0_18 = arith.constant 0 : index
    %c0_19 = arith.constant 0 : index
    %c0_20 = arith.constant 0 : index
    %38 = vector.load %arg6[%c0_18, %c0_19, %c0_20] : memref<1x4x128xf32, #tpu.memory_space<vmem>>, vector<1x1x128xf32>
    %39 = vector.shape_cast %38 : vector<1x1x128xf32> to vector<1x128xf32>
    %40 = vector.broadcast %39 : vector<1x128xf32> to vector<9x128xf32>
    %41 = arith.mulf %40, %37 : vector<9x128xf32>
    %42 = arith.addf %34, %41 : vector<9x128xf32>
    %cst_21 = arith.constant 0.000000e+00 : f32
    %43 = vector.broadcast %cst_21 : f32 to vector<2x128xf32>
    %44 = vector.extract_strided_slice %25 {offsets = [0, 0], sizes = [7, 128], strides = [1, 1]} : vector<9x128xf32> to vector<7x128xf32>
    %45 = tpu.concatenate %43, %44 in 0 : vector<2x128xf32>, vector<7x128xf32> -> vector<9x128xf32>
    %c0_22 = arith.constant 0 : index
    %c1 = arith.constant 1 : index
    %c0_23 = arith.constant 0 : index
    %46 = vector.load %arg6[%c0_22, %c1, %c0_23] : memref<1x4x128xf32, #tpu.memory_space<vmem>>, vector<1x1x128xf32>
    %47 = vector.shape_cast %46 : vector<1x1x128xf32> to vector<1x128xf32>
    %48 = vector.broadcast %47 : vector<1x128xf32> to vector<9x128xf32>
    %49 = arith.mulf %48, %45 : vector<9x128xf32>
    %50 = arith.addf %42, %49 : vector<9x128xf32>
    %cst_24 = arith.constant 0.000000e+00 : f32
    %51 = vector.broadcast %cst_24 : f32 to vector<1x128xf32>
    %52 = vector.extract_strided_slice %25 {offsets = [0, 0], sizes = [8, 128], strides = [1, 1]} : vector<9x128xf32> to vector<8x128xf32>
    %53 = tpu.concatenate %51, %52 in 0 : vector<1x128xf32>, vector<8x128xf32> -> vector<9x128xf32>
    %c0_25 = arith.constant 0 : index
    %c2 = arith.constant 2 : index
    %c0_26 = arith.constant 0 : index
    %54 = vector.load %arg6[%c0_25, %c2, %c0_26] : memref<1x4x128xf32, #tpu.memory_space<vmem>>, vector<1x1x128xf32>
    %55 = vector.shape_cast %54 : vector<1x1x128xf32> to vector<1x128xf32>
    %56 = vector.broadcast %55 : vector<1x128xf32> to vector<9x128xf32>
    %57 = arith.mulf %56, %53 : vector<9x128xf32>
    %58 = arith.addf %50, %57 : vector<9x128xf32>
    %59 = arith.negf %58 : vector<9x128xf32>
    %60 = math.exp %59 : vector<9x128xf32>
    %cst_27 = arith.constant 1.000000e+00 : f32
    %61 = vector.broadcast %cst_27 : f32 to vector<9x128xf32>
    %62 = arith.addf %61, %60 : vector<9x128xf32>
    %63 = arith.divf %61, %62 : vector<9x128xf32>
    %64 = arith.mulf %58, %63 : vector<9x128xf32>
    %65 = vector.extract_strided_slice %64 {offsets = [0, 0], sizes = [9, 64], strides = [1, 1]} : vector<9x128xf32> to vector<9x64xf32>
    %66 = vector.extract_strided_slice %64 {offsets = [0, 64], sizes = [9, 32], strides = [1, 1]} : vector<9x128xf32> to vector<9x32xf32>
    %67 = vector.extract_strided_slice %64 {offsets = [0, 96], sizes = [9, 32], strides = [1, 1]} : vector<9x128xf32> to vector<9x32xf32>
    %c0_28 = arith.constant 0 : index
    %c0_29 = arith.constant 0 : index
    %c0_30 = arith.constant 0 : index
    %68 = vector.load %arg9[%c0_28, %c0_29, %c0_30] : memref<1x1x4xf32, #tpu.memory_space<vmem>>, vector<1x1x4xf32>
    %69 = vector.shape_cast %68 : vector<1x1x4xf32> to vector<1x4xf32>
    %70 = vector.broadcast %69 : vector<1x4xf32> to vector<9x4xf32>
    %71 = arith.addf %26, %70 : vector<9x4xf32>
    %cst_31 = arith.constant 2.000000e+01 : f32
    %72 = vector.broadcast %cst_31 : f32 to vector<9x4xf32>
    %73 = arith.cmpf ogt, %71, %72 : vector<9x4xf32>
    %cst_32 = arith.constant 2.000000e+01 : f32
    %74 = vector.broadcast %cst_32 : f32 to vector<9x4xf32>
    %75 = arith.minimumf %71, %74 : vector<9x4xf32>
    %76 = math.exp %75 : vector<9x4xf32>
    %77 = math.log1p %76 : vector<9x4xf32>
    %78 = arith.select %73, %71, %77 : vector<9x4xi1>, vector<9x4xf32>
    %c0_33 = arith.constant 0 : index
    %c0_34 = arith.constant 0 : index
    %c0_35 = arith.constant 0 : index
    %79 = vector.load %arg8[%c0_33, %c0_34, %c0_35] : memref<1x1x4xf32, #tpu.memory_space<vmem>>, vector<1x1x4xf32>
    %80 = vector.shape_cast %79 : vector<1x1x4xf32> to vector<1x4xf32>
    %81 = math.exp %80 : vector<1x4xf32>
    %cst_36 = arith.constant 0.000000e+00 : f32
    %82 = vector.broadcast %cst_36 : f32 to vector<1x4xf32>
    %83 = arith.subf %82, %81 : vector<1x4xf32>
    %84 = vector.broadcast %83 : vector<1x4xf32> to vector<9x4xf32>
    %85 = arith.mulf %78, %84 : vector<9x4xf32>
    %86 = tpu.iota {dimensions = array<i32: 0>} : vector<9x9xi32>
    %87 = tpu.iota {dimensions = array<i32: 1>} : vector<9x9xi32>
    %88 = arith.cmpi sge, %86, %87 : vector<9x9xi32>
    %89 = arith.extui %88 : vector<9x9xi1> to vector<9x9xi32>
    %90 = arith.sitofp %89 : vector<9x9xi32> to vector<9x9xf32>
    %cst_37 = arith.constant dense<0.000000e+00> : vector<9x4xf32>
    %91 = tpu.matmul %90, %85, %cst_37 {dimension_numbers = #tpu.dot_dimension_numbers<[1], [0], [0], [1], [0, 0, 1, 1], [], []>} : vector<9x9xf32>, vector<9x4xf32>, vector<9x4xf32> -> vector<9x4xf32>
    %92 = tpu.transpose %91, [1, 0] : vector<9x4xf32> -> vector<4x9xf32>
    %93 = arith.truncf %67 : vector<9x32xf32> to vector<9x32xbf16>
    %94 = tpu.transpose %66, [1, 0] : vector<9x32xf32> -> vector<32x9xf32>
    %95 = arith.truncf %94 : vector<32x9xf32> to vector<32x9xbf16>
    %cst_38 = arith.constant dense<0.000000e+00> : vector<9x9xf32>
    %96 = tpu.matmul %93, %95, %cst_38 {dimension_numbers = #tpu.dot_dimension_numbers<[1], [0], [0], [1], [0, 0, 1, 1], [], []>} : vector<9x32xbf16>, vector<32x9xbf16>, vector<9x9xf32> -> vector<9x9xf32>
    %97 = vector.extract_strided_slice %91 {offsets = [0, 0], sizes = [9, 1], strides = [1, 1]} : vector<9x4xf32> to vector<9x1xf32>
    %98 = vector.extract_strided_slice %92 {offsets = [0, 0], sizes = [1, 9], strides = [1, 1]} : vector<4x9xf32> to vector<1x9xf32>
    %99 = vector.broadcast %97 : vector<9x1xf32> to vector<9x9xf32>
    %100 = vector.broadcast %98 : vector<1x9xf32> to vector<9x9xf32>
    %101 = arith.subf %99, %100 : vector<9x9xf32>
    %cst_39 = arith.constant 0.000000e+00 : f32
    %102 = vector.broadcast %cst_39 : f32 to vector<9x9xf32>
    %103 = arith.minimumf %101, %102 : vector<9x9xf32>
    %104 = math.exp %103 : vector<9x9xf32>
    %105 = arith.mulf %90, %104 : vector<9x9xf32>
    %106 = arith.mulf %96, %105 : vector<9x9xf32>
    %107 = arith.truncf %106 : vector<9x9xf32> to vector<9x9xbf16>
    %108 = vector.extract_strided_slice %78 {offsets = [0, 0], sizes = [9, 1], strides = [1, 1]} : vector<9x4xf32> to vector<9x1xf32>
    %109 = vector.extract_strided_slice %65 {offsets = [0, 0], sizes = [9, 16], strides = [1, 1]} : vector<9x64xf32> to vector<9x16xf32>
    %110 = vector.broadcast %108 : vector<9x1xf32> to vector<9x16xf32>
    %111 = arith.mulf %110, %109 : vector<9x16xf32>
    %112 = arith.truncf %111 : vector<9x16xf32> to vector<9x16xbf16>
    %cst_40 = arith.constant dense<0.000000e+00> : vector<9x16xf32>
    %113 = tpu.matmul %107, %112, %cst_40 {dimension_numbers = #tpu.dot_dimension_numbers<[1], [0], [0], [1], [0, 0, 1, 1], [], []>} : vector<9x9xbf16>, vector<9x16xbf16>, vector<9x16xf32> -> vector<9x16xf32>
    %114 = vector.extract_strided_slice %91 {offsets = [0, 1], sizes = [9, 1], strides = [1, 1]} : vector<9x4xf32> to vector<9x1xf32>
    %115 = vector.extract_strided_slice %92 {offsets = [1, 0], sizes = [1, 9], strides = [1, 1]} : vector<4x9xf32> to vector<1x9xf32>
    %116 = vector.broadcast %114 : vector<9x1xf32> to vector<9x9xf32>
    %117 = vector.broadcast %115 : vector<1x9xf32> to vector<9x9xf32>
    %118 = arith.subf %116, %117 : vector<9x9xf32>
    %cst_41 = arith.constant 0.000000e+00 : f32
    %119 = vector.broadcast %cst_41 : f32 to vector<9x9xf32>
    %120 = arith.minimumf %118, %119 : vector<9x9xf32>
    %121 = math.exp %120 : vector<9x9xf32>
    %122 = arith.mulf %90, %121 : vector<9x9xf32>
    %123 = arith.mulf %96, %122 : vector<9x9xf32>
    %124 = arith.truncf %123 : vector<9x9xf32> to vector<9x9xbf16>
    %125 = vector.extract_strided_slice %78 {offsets = [0, 1], sizes = [9, 1], strides = [1, 1]} : vector<9x4xf32> to vector<9x1xf32>
    %126 = vector.extract_strided_slice %65 {offsets = [0, 16], sizes = [9, 16], strides = [1, 1]} : vector<9x64xf32> to vector<9x16xf32>
    %127 = vector.broadcast %125 : vector<9x1xf32> to vector<9x16xf32>
    %128 = arith.mulf %127, %126 : vector<9x16xf32>
    %129 = arith.truncf %128 : vector<9x16xf32> to vector<9x16xbf16>
    %cst_42 = arith.constant dense<0.000000e+00> : vector<9x16xf32>
    %130 = tpu.matmul %124, %129, %cst_42 {dimension_numbers = #tpu.dot_dimension_numbers<[1], [0], [0], [1], [0, 0, 1, 1], [], []>} : vector<9x9xbf16>, vector<9x16xbf16>, vector<9x16xf32> -> vector<9x16xf32>
    %131 = vector.extract_strided_slice %91 {offsets = [0, 2], sizes = [9, 1], strides = [1, 1]} : vector<9x4xf32> to vector<9x1xf32>
    %132 = vector.extract_strided_slice %92 {offsets = [2, 0], sizes = [1, 9], strides = [1, 1]} : vector<4x9xf32> to vector<1x9xf32>
    %133 = vector.broadcast %131 : vector<9x1xf32> to vector<9x9xf32>
    %134 = vector.broadcast %132 : vector<1x9xf32> to vector<9x9xf32>
    %135 = arith.subf %133, %134 : vector<9x9xf32>
    %cst_43 = arith.constant 0.000000e+00 : f32
    %136 = vector.broadcast %cst_43 : f32 to vector<9x9xf32>
    %137 = arith.minimumf %135, %136 : vector<9x9xf32>
    %138 = math.exp %137 : vector<9x9xf32>
    %139 = arith.mulf %90, %138 : vector<9x9xf32>
    %140 = arith.mulf %96, %139 : vector<9x9xf32>
    %141 = arith.truncf %140 : vector<9x9xf32> to vector<9x9xbf16>
    %142 = vector.extract_strided_slice %78 {offsets = [0, 2], sizes = [9, 1], strides = [1, 1]} : vector<9x4xf32> to vector<9x1xf32>
    %143 = vector.extract_strided_slice %65 {offsets = [0, 32], sizes = [9, 16], strides = [1, 1]} : vector<9x64xf32> to vector<9x16xf32>
    %144 = vector.broadcast %142 : vector<9x1xf32> to vector<9x16xf32>
    %145 = arith.mulf %144, %143 : vector<9x16xf32>
    %146 = arith.truncf %145 : vector<9x16xf32> to vector<9x16xbf16>
    %cst_44 = arith.constant dense<0.000000e+00> : vector<9x16xf32>
    %147 = tpu.matmul %141, %146, %cst_44 {dimension_numbers = #tpu.dot_dimension_numbers<[1], [0], [0], [1], [0, 0, 1, 1], [], []>} : vector<9x9xbf16>, vector<9x16xbf16>, vector<9x16xf32> -> vector<9x16xf32>
    %148 = vector.extract_strided_slice %91 {offsets = [0, 3], sizes = [9, 1], strides = [1, 1]} : vector<9x4xf32> to vector<9x1xf32>
    %149 = vector.extract_strided_slice %92 {offsets = [3, 0], sizes = [1, 9], strides = [1, 1]} : vector<4x9xf32> to vector<1x9xf32>
    %150 = vector.broadcast %148 : vector<9x1xf32> to vector<9x9xf32>
    %151 = vector.broadcast %149 : vector<1x9xf32> to vector<9x9xf32>
    %152 = arith.subf %150, %151 : vector<9x9xf32>
    %cst_45 = arith.constant 0.000000e+00 : f32
    %153 = vector.broadcast %cst_45 : f32 to vector<9x9xf32>
    %154 = arith.minimumf %152, %153 : vector<9x9xf32>
    %155 = math.exp %154 : vector<9x9xf32>
    %156 = arith.mulf %90, %155 : vector<9x9xf32>
    %157 = arith.mulf %96, %156 : vector<9x9xf32>
    %158 = arith.truncf %157 : vector<9x9xf32> to vector<9x9xbf16>
    %159 = vector.extract_strided_slice %78 {offsets = [0, 3], sizes = [9, 1], strides = [1, 1]} : vector<9x4xf32> to vector<9x1xf32>
    %160 = vector.extract_strided_slice %65 {offsets = [0, 48], sizes = [9, 16], strides = [1, 1]} : vector<9x64xf32> to vector<9x16xf32>
    %161 = vector.broadcast %159 : vector<9x1xf32> to vector<9x16xf32>
    %162 = arith.mulf %161, %160 : vector<9x16xf32>
    %163 = arith.truncf %162 : vector<9x16xf32> to vector<9x16xbf16>
    %cst_46 = arith.constant dense<0.000000e+00> : vector<9x16xf32>
    %164 = tpu.matmul %158, %163, %cst_46 {dimension_numbers = #tpu.dot_dimension_numbers<[1], [0], [0], [1], [0, 0, 1, 1], [], []>} : vector<9x9xbf16>, vector<9x16xbf16>, vector<9x16xf32> -> vector<9x16xf32>
    %165 = tpu.concatenate %113, %130, %147, %164 in 1 : vector<9x16xf32>, vector<9x16xf32>, vector<9x16xf32>, vector<9x16xf32> -> vector<9x64xf32>
    %c0_47 = arith.constant 0 : index
    %c0_48 = arith.constant 0 : index
    %c0_49 = arith.constant 0 : index
    %166 = vector.load %arg10[%c0_47, %c0_48, %c0_49] : memref<1x1x64xf32, #tpu.memory_space<vmem>>, vector<1x1x64xf32>
    %167 = vector.shape_cast %166 : vector<1x1x64xf32> to vector<1x64xf32>
    %168 = vector.broadcast %167 : vector<1x64xf32> to vector<9x64xf32>
    %169 = arith.mulf %65, %168 : vector<9x64xf32>
    %170 = arith.addf %165, %169 : vector<9x64xf32>
    %171 = arith.negf %24 : vector<9x64xf32>
    %172 = math.exp %171 : vector<9x64xf32>
    %cst_50 = arith.constant 1.000000e+00 : f32
    %173 = vector.broadcast %cst_50 : f32 to vector<9x64xf32>
    %174 = arith.addf %173, %172 : vector<9x64xf32>
    %175 = arith.divf %173, %174 : vector<9x64xf32>
    %176 = arith.mulf %24, %175 : vector<9x64xf32>
    %177 = arith.mulf %170, %176 : vector<9x64xf32>
    %c0_51 = arith.constant 0 : index
    %c0_52 = arith.constant 0 : index
    %c0_53 = arith.constant 0 : index
    %178 = vector.load %arg11[%c0_51, %c0_52, %c0_53] : memref<1x1x64xf32, #tpu.memory_space<vmem>>, vector<1x1x64xf32>
    %179 = vector.shape_cast %178 : vector<1x1x64xf32> to vector<1x64xf32>
    %180 = arith.mulf %177, %177 : vector<9x64xf32>
    %cst_54 = arith.constant dense<0.000000e+00> : vector<9xf32>
    %181 = vector.multi_reduction <add>, %180, %cst_54 [1] : vector<9x64xf32> to vector<9xf32>
    %182 = vector.shape_cast %181 : vector<9xf32> to vector<9x1xf32>
    %cst_55 = arith.constant 6.400000e+01 : f32
    %183 = vector.broadcast %cst_55 : f32 to vector<9x1xf32>
    %184 = arith.divf %182, %183 : vector<9x1xf32>
    %cst_56 = arith.constant 9.99999974E-6 : f32
    %185 = vector.broadcast %cst_56 : f32 to vector<9x1xf32>
    %186 = arith.addf %184, %185 : vector<9x1xf32>
    %187 = math.rsqrt %186 : vector<9x1xf32>
    %188 = vector.broadcast %187 : vector<9x1xf32> to vector<9x64xf32>
    %189 = arith.mulf %177, %188 : vector<9x64xf32>
    %190 = vector.broadcast %179 : vector<1x64xf32> to vector<9x64xf32>
    %191 = arith.mulf %189, %190 : vector<9x64xf32>
    %c0_57 = arith.constant 0 : index
    %c0_58 = arith.constant 0 : index
    %c0_59 = arith.constant 0 : index
    %192 = vector.load %arg12[%c0_57, %c0_58, %c0_59] : memref<1x64x32xf32, #tpu.memory_space<vmem>>, vector<1x64x32xf32>
    %193 = vector.shape_cast %192 : vector<1x64x32xf32> to vector<64x32xf32>
    %194 = arith.truncf %191 : vector<9x64xf32> to vector<9x64xbf16>
    %195 = arith.truncf %193 : vector<64x32xf32> to vector<64x32xbf16>
    %cst_60 = arith.constant dense<0.000000e+00> : vector<9x32xf32>
    %196 = tpu.matmul %194, %195, %cst_60 {dimension_numbers = #tpu.dot_dimension_numbers<[1], [0], [0], [1], [0, 0, 1, 1], [], []>} : vector<9x64xbf16>, vector<64x32xbf16>, vector<9x32xf32> -> vector<9x32xf32>
    %197 = arith.addf %4, %196 : vector<9x32xf32>
    %c0_61 = arith.constant 0 : index
    %c0_62 = arith.constant 0 : index
    %c0_63 = arith.constant 0 : index
    %198 = vector.load %arg4[%c0_61, %c0_62, %c0_63] : memref<1x1x32xf32, #tpu.memory_space<vmem>>, vector<1x1x32xf32>
    %199 = vector.shape_cast %198 : vector<1x1x32xf32> to vector<1x32xf32>
    %200 = arith.mulf %197, %197 : vector<9x32xf32>
    %cst_64 = arith.constant dense<0.000000e+00> : vector<9xf32>
    %201 = vector.multi_reduction <add>, %200, %cst_64 [1] : vector<9x32xf32> to vector<9xf32>
    %202 = vector.shape_cast %201 : vector<9xf32> to vector<9x1xf32>
    %cst_65 = arith.constant 3.200000e+01 : f32
    %203 = vector.broadcast %cst_65 : f32 to vector<9x1xf32>
    %204 = arith.divf %202, %203 : vector<9x1xf32>
    %cst_66 = arith.constant 9.99999997E-7 : f32
    %205 = vector.broadcast %cst_66 : f32 to vector<9x1xf32>
    %206 = arith.addf %204, %205 : vector<9x1xf32>
    %207 = math.rsqrt %206 : vector<9x1xf32>
    %208 = vector.broadcast %207 : vector<9x1xf32> to vector<9x32xf32>
    %209 = arith.mulf %197, %208 : vector<9x32xf32>
    %210 = vector.broadcast %199 : vector<1x32xf32> to vector<9x32xf32>
    %211 = arith.mulf %209, %210 : vector<9x32xf32>
    %c0_67 = arith.constant 0 : index
    %c0_68 = arith.constant 0 : index
    %c0_69 = arith.constant 0 : index
    %212 = vector.load %arg13[%c0_67, %c0_68, %c0_69] : memref<1x32x128xf32, #tpu.memory_space<vmem>>, vector<1x32x128xf32>
    %213 = vector.shape_cast %212 : vector<1x32x128xf32> to vector<32x128xf32>
    %c0_70 = arith.constant 0 : index
    %c0_71 = arith.constant 0 : index
    %c0_72 = arith.constant 0 : index
    %214 = vector.load %arg14[%c0_70, %c0_71, %c0_72] : memref<1x1x128xf32, #tpu.memory_space<vmem>>, vector<1x1x128xf32>
    %215 = vector.shape_cast %214 : vector<1x1x128xf32> to vector<1x128xf32>
    %216 = arith.truncf %211 : vector<9x32xf32> to vector<9x32xbf16>
    %217 = arith.truncf %213 : vector<32x128xf32> to vector<32x128xbf16>
    %cst_73 = arith.constant dense<0.000000e+00> : vector<9x128xf32>
    %218 = tpu.matmul %216, %217, %cst_73 {dimension_numbers = #tpu.dot_dimension_numbers<[1], [0], [0], [1], [0, 0, 1, 1], [], []>} : vector<9x32xbf16>, vector<32x128xbf16>, vector<9x128xf32> -> vector<9x128xf32>
    %219 = vector.broadcast %215 : vector<1x128xf32> to vector<9x128xf32>
    %220 = arith.addf %218, %219 : vector<9x128xf32>
    %221 = arith.negf %220 : vector<9x128xf32>
    %222 = math.exp %221 : vector<9x128xf32>
    %cst_74 = arith.constant 1.000000e+00 : f32
    %223 = vector.broadcast %cst_74 : f32 to vector<9x128xf32>
    %224 = arith.addf %223, %222 : vector<9x128xf32>
    %225 = arith.divf %223, %224 : vector<9x128xf32>
    %226 = arith.mulf %220, %225 : vector<9x128xf32>
    %c0_75 = arith.constant 0 : index
    %c0_76 = arith.constant 0 : index
    %c0_77 = arith.constant 0 : index
    %227 = vector.load %arg15[%c0_75, %c0_76, %c0_77] : memref<1x128x32xf32, #tpu.memory_space<vmem>>, vector<1x128x32xf32>
    %228 = vector.shape_cast %227 : vector<1x128x32xf32> to vector<128x32xf32>
    %c0_78 = arith.constant 0 : index
    %c0_79 = arith.constant 0 : index
    %c0_80 = arith.constant 0 : index
    %229 = vector.load %arg16[%c0_78, %c0_79, %c0_80] : memref<1x1x32xf32, #tpu.memory_space<vmem>>, vector<1x1x32xf32>
    %230 = vector.shape_cast %229 : vector<1x1x32xf32> to vector<1x32xf32>
    %231 = arith.truncf %226 : vector<9x128xf32> to vector<9x128xbf16>
    %232 = arith.truncf %228 : vector<128x32xf32> to vector<128x32xbf16>
    %cst_81 = arith.constant dense<0.000000e+00> : vector<9x32xf32>
    %233 = tpu.matmul %231, %232, %cst_81 {dimension_numbers = #tpu.dot_dimension_numbers<[1], [0], [0], [1], [0, 0, 1, 1], [], []>} : vector<9x128xbf16>, vector<128x32xbf16>, vector<9x32xf32> -> vector<9x32xf32>
    %234 = vector.broadcast %230 : vector<1x32xf32> to vector<9x32xf32>
    %235 = arith.addf %233, %234 : vector<9x32xf32>
    %236 = arith.addf %197, %235 : vector<9x32xf32>
    %c0_82 = arith.constant 0 : index
    %c0_83 = arith.constant 0 : index
    %c0_84 = arith.constant 0 : index
    %237 = vector.load %arg17[%c0_82, %c0_83, %c0_84] : memref<1x9x32xf32, #tpu.memory_space<vmem>>, vector<1x9x32xf32>
    %238 = vector.shape_cast %237 : vector<1x9x32xf32> to vector<9x32xf32>
    %239 = vector.shape_cast %236 : vector<9x32xf32> to vector<1x9x32xf32>
    tpu.vector_store %arg17[%c0_82, %c0_83, %c0_84], %239 {strides = array<i32>} : memref<1x9x32xf32, #tpu.memory_space<vmem>>, vector<1x9x32xf32>,
    return
  }
  func.func @transform_0(%arg0: i32, %arg1: i32) -> (i32, i32, i32) {
    %c0_i32 = arith.constant 0 : i32
    %c0_i32_0 = arith.constant 0 : i32
    %c0_i32_1 = arith.constant 0 : i32
    return %arg0, %c0_i32, %c0_i32_0 : i32, i32, i32
  }
  func.func @transform_1(%arg0: i32, %arg1: i32) -> (i32, i32, i32) {
    %c0_i32 = arith.constant 0 : i32
    %c0_i32_0 = arith.constant 0 : i32
    %c0_i32_1 = arith.constant 0 : i32
    return %arg1, %c0_i32, %c0_i32_0 : i32, i32, i32
  }
  func.func @transform_2(%arg0: i32, %arg1: i32) -> (i32, i32, i32) {
    %c0_i32 = arith.constant 0 : i32
    %c0_i32_0 = arith.constant 0 : i32
    %c0_i32_1 = arith.constant 0 : i32
    return %arg1, %c0_i32, %c0_i32_0 : i32, i32, i32
  }
  func.func @transform_3(%arg0: i32, %arg1: i32) -> (i32, i32, i32) {
    %c0_i32 = arith.constant 0 : i32
    %c0_i32_0 = arith.constant 0 : i32
    %c0_i32_1 = arith.constant 0 : i32
    return %arg1, %c0_i32, %c0_i32_0 : i32, i32, i32
  }
  func.func @transform_4(%arg0: i32, %arg1: i32) -> (i32, i32, i32) {
    %c0_i32 = arith.constant 0 : i32
    %c0_i32_0 = arith.constant 0 : i32
    %c0_i32_1 = arith.constant 0 : i32
    return %arg1, %c0_i32, %c0_i32_0 : i32, i32, i32
  }
  func.func @transform_5(%arg0: i32, %arg1: i32) -> (i32, i32, i32) {
    %c0_i32 = arith.constant 0 : i32
    %c0_i32_0 = arith.constant 0 : i32
    %c0_i32_1 = arith.constant 0 : i32
    return %arg1, %c0_i32, %c0_i32_0 : i32, i32, i32
  }
  func.func @transform_6(%arg0: i32, %arg1: i32) -> (i32, i32, i32) {
    %c0_i32 = arith.constant 0 : i32
    %c0_i32_0 = arith.constant 0 : i32
    %c0_i32_1 = arith.constant 0 : i32
    return %arg1, %c0_i32, %c0_i32_0 : i32, i32, i32
  }
  func.func @transform_7(%arg0: i32, %arg1: i32) -> (i32, i32, i32) {
    %c0_i32 = arith.constant 0 : i32
    %c0_i32_0 = arith.constant 0 : i32
    %c0_i32_1 = arith.constant 0 : i32
    return %arg1, %c0_i32, %c0_i32_0 : i32, i32, i32
  }
  func.func @transform_8(%arg0: i32, %arg1: i32) -> (i32, i32, i32) {
    %c0_i32 = arith.constant 0 : i32
    %c0_i32_0 = arith.constant 0 : i32
    %c0_i32_1 = arith.constant 0 : i32
    return %arg1, %c0_i32, %c0_i32_0 : i32, i32, i32
  }
  func.func @transform_9(%arg0: i32, %arg1: i32) -> (i32, i32, i32) {
    %c0_i32 = arith.constant 0 : i32
    %c0_i32_0 = arith.constant 0 : i32
    %c0_i32_1 = arith.constant 0 : i32
    return %arg1, %c0_i32, %c0_i32_0 : i32, i32, i32
  }
  func.func @transform_10(%arg0: i32, %arg1: i32) -> (i32, i32, i32) {
    %c0_i32 = arith.constant 0 : i32
    %c0_i32_0 = arith.constant 0 : i32
    %c0_i32_1 = arith.constant 0 : i32
    return %arg1, %c0_i32, %c0_i32_0 : i32, i32, i32
  }
  func.func @transform_11(%arg0: i32, %arg1: i32) -> (i32, i32, i32) {
    %c0_i32 = arith.constant 0 : i32
    %c0_i32_0 = arith.constant 0 : i32
    %c0_i32_1 = arith.constant 0 : i32
    return %arg1, %c0_i32, %c0_i32_0 : i32, i32, i32
  }
  func.func @transform_12(%arg0: i32, %arg1: i32) -> (i32, i32, i32) {
    %c0_i32 = arith.constant 0 : i32
    %c0_i32_0 = arith.constant 0 : i32
    %c0_i32_1 = arith.constant 0 : i32
    return %arg1, %c0_i32, %c0_i32_0 : i32, i32, i32
  }
  func.func @transform_13(%arg0: i32, %arg1: i32) -> (i32, i32, i32) {
    %c0_i32 = arith.constant 0 : i32
    %c0_i32_0 = arith.constant 0 : i32
    %c0_i32_1 = arith.constant 0 : i32
    return %arg1, %c0_i32, %c0_i32_0 : i32, i32, i32
  }
  func.func @transform_14(%arg0: i32, %arg1: i32) -> (i32, i32, i32) {
    %c0_i32 = arith.constant 0 : i32
    %c0_i32_0 = arith.constant 0 : i32
    %c0_i32_1 = arith.constant 0 : i32
    return %arg1, %c0_i32, %c0_i32_0 : i32, i32, i32
  }
  func.func @transform_15(%arg0: i32, %arg1: i32) -> (i32, i32, i32) {
    %c0_i32 = arith.constant 0 : i32
    %c0_i32_0 = arith.constant 0 : i32
    %c0_i32_1 = arith.constant 0 : i32
    return %arg0, %c0_i32, %c0_i32_0 : i32, i32, i32
  }
}

</mosaic_0001>

<llo_original>
// kernel: tpu_custom_call.1
$region0: #{tpu_custom_call.1}
  #allocation0 [shape = 'u32[]', space=smem, size = 0x4, offset = 0x4, fixed_abs, tag = 'smem constant byte address 0x4 - core index']
  #allocation1 [shape = 'u32[144,128]{1,0:T(1,128)}', space=vmem, size = 0x12000, scoped, tag = 'internal scratch']
  %s0 = inlined_call_operand.vmem [shape: f32[2,9,32], index: 0, kind: input, shape index: {}]
  %s1 = inlined_call_operand.vmem [shape: f32[2,1,32], index: 1, kind: input, shape index: {}]
  %s2 = inlined_call_operand.vmem [shape: f32[2,1,32], index: 2, kind: input, shape index: {}]
  %s3 = inlined_call_operand.vmem [shape: f32[2,32,196], index: 3, kind: input, shape index: {}]
  %s4 = inlined_call_operand.vmem [shape: f32[2,4,128], index: 4, kind: input, shape index: {}]
  %s5 = inlined_call_operand.vmem [shape: f32[2,1,128], index: 5, kind: input, shape index: {}]
  %s6 = inlined_call_operand.vmem [shape: f32[2,1,4], index: 6, kind: input, shape index: {}]
  %s7 = inlined_call_operand.vmem [shape: f32[2,1,4], index: 7, kind: input, shape index: {}]
  %s8 = inlined_call_operand.vmem [shape: f32[2,1,64], index: 8, kind: input, shape index: {}]
  %s9 = inlined_call_operand.vmem [shape: f32[2,1,64], index: 9, kind: input, shape index: {}]
  %s10 = inlined_call_operand.vmem [shape: f32[2,64,32], index: 10, kind: input, shape index: {}]
  %s11 = inlined_call_operand.vmem [shape: f32[2,32,128], index: 11, kind: input, shape index: {}]
  %s12 = inlined_call_operand.vmem [shape: f32[2,1,128], index: 12, kind: input, shape index: {}]
  %s13 = inlined_call_operand.vmem [shape: f32[2,128,32], index: 13, kind: input, shape index: {}]
  %s14 = inlined_call_operand.vmem [shape: f32[2,1,32], index: 14, kind: input, shape index: {}]
  %s15 = inlined_call_operand.vmem [shape: f32[2,9,32], index: 15, kind: output, shape index: {}]
  %s16 = sld [smem:[#allocation0]]
  $region97: #{tpu_custom_call.1} parent=0
    _
  %s18 = ssub.s32 1, %s16
  %s19 = scalar_select 0, %s18, %s16
  loop: start=0, step=1, limit=6
  $region2: #{tpu_custom_call.1} parent=0 // loop_pre_header
    _
  $region3: #{tpu_custom_call.1} parent=0 // loop_header
    %s21 = sphi 0, %s25
    %p22 = scmp.ge.s32.totalorder %s21, 6
    %s28 = sphi 0, %s40
    %s29 = sphi 0, %s36
    %s30 = sphi 0, %s28
    %s31 = sphi 0, %s29
    %s32 = sphi 0, %s30
    %s33 = sphi 0, %s31
    %s43 = sphi 0, %s45
    %s46 = sphi 0, %s43
    %s47 = sphi 0, %s46
    %s63 = sphi 0, %s47
    %s69 = sphi 0, %s71
    %s72 = sphi 0, %s69
    %s73 = sphi 0, %s72
    %s89 = sphi 0, %s73
    %s95 = sphi 0, %s97
    %s98 = sphi 0, %s95
    %s99 = sphi 0, %s98
    %s115 = sphi 0, %s99
    %s121 = sphi 0, %s123
    %s124 = sphi 0, %s121
    %s125 = sphi 0, %s124
    %s141 = sphi 0, %s125
    %s147 = sphi 0, %s149
    %s150 = sphi 0, %s147
    %s151 = sphi 0, %s150
    %s167 = sphi 0, %s151
    %s173 = sphi 0, %s175
    %s176 = sphi 0, %s173
    %s177 = sphi 0, %s176
    %s193 = sphi 0, %s177
    %s199 = sphi 0, %s201
    %s202 = sphi 0, %s199
    %s203 = sphi 0, %s202
    %s219 = sphi 0, %s203
    %s225 = sphi 0, %s227
    %s228 = sphi 0, %s225
    %s229 = sphi 0, %s228
    %s245 = sphi 0, %s229
    %s251 = sphi 0, %s253
    %s254 = sphi 0, %s251
    %s255 = sphi 0, %s254
    %s271 = sphi 0, %s255
    %s277 = sphi 0, %s279
    %s280 = sphi 0, %s277
    %s281 = sphi 0, %s280
    %s297 = sphi 0, %s281
    %s303 = sphi 0, %s305
    %s306 = sphi 0, %s303
    %s307 = sphi 0, %s306
    %s323 = sphi 0, %s307
    %s329 = sphi 0, %s331
    %s332 = sphi 0, %s329
    %s333 = sphi 0, %s332
    %s349 = sphi 0, %s333
    %s355 = sphi 0, %s357
    %s358 = sphi 0, %s355
    %s359 = sphi 0, %s358
    %s375 = sphi 0, %s359
    %s381 = sphi 0, %s383
    %s384 = sphi 0, %s381
    %s385 = sphi 0, %s384
    %s401 = sphi 0, %s385
    %s407 = sphi 0, %s409
    %s410 = sphi 0, %s407
    %s411 = sphi 0, %s410
    %s427 = sphi 0, %s411
    %s433 = sphi 0, %s435
    %s436 = sphi 0, %s433
    %s437 = sphi 0, %s436
    %s453 = sphi 0, %s437
  $region4: #{tpu_custom_call.1} parent=0 // loop_header_branch
    %24 = sbr.rel (%p22) target = $region8
  $region5: #{tpu_custom_call.1} parent=0 // loop_body
    %s26 = ssub.s32 %s21, 1
    %s27 = ssub.s32 %s21, 2
    %s34 = sadd.s32 1, %s29
    %p35 = scmp.ge.s32.totalorder %s34, 2
    %s36 = scalar_select %p35, 0, %s34
    %s37 = sadd.s32 1, %s28
    %s38 = scalar_select %p35, %s37, %s28
    %p39 = scmp.ge.s32.totalorder %s38, 2
    %s40 = scalar_select %p39, 0, %s38
    %s41 = ssub.s32 %s28, %s40
    %p42 = scmp.eq.s32.totalorder %s41, 0
    %s44 = sadd.s32 %s43, 1
    %s45 = scalar_select %p42, %s43, %s44
    %p48 = pneg %p42
    %p49 = scmp.eq.s32.totalorder %s21, 3
    %p50 = por %p48, %p49
    %p51 = scmp.ne.s32.totalorder %s43, %s46
    %p52 = scmp.eq.s32.totalorder %s21, 0
    %p53 = por %p51, %p52
    %p54 = scmp.ne.s32.totalorder %s43, %s46
    %p55 = scmp.eq.s32.totalorder %s26, 3
    %p56 = por %p54, %p55
    %p57 = scmp.ne.s32.totalorder %s46, %s47
    %p58 = scmp.eq.s32.totalorder %s26, 0
    %p59 = por %p57, %p58
    %p60 = scmp.ne.s32.totalorder %s46, %s47
    %p61 = scmp.eq.s32.totalorder %s27, 3
    %p62 = por %p60, %p61
    %p64 = scmp.ne.s32.totalorder %s47, %s63
    %p65 = scmp.eq.s32.totalorder %s27, 0
    %p66 = por %p64, %p65
    %s67 = ssub.s32 %s29, %s36
    %p68 = scmp.eq.s32.totalorder %s67, 0
    %s70 = sadd.s32 %s69, 1
    %s71 = scalar_select %p68, %s69, %s70
    %p74 = pneg %p68
    %p75 = scmp.eq.s32.totalorder %s21, 3
    %p76 = por %p74, %p75
    %p77 = scmp.ne.s32.totalorder %s69, %s72
    %p78 = scmp.eq.s32.totalorder %s21, 0
    %p79 = por %p77, %p78
    %p80 = scmp.ne.s32.totalorder %s69, %s72
    %p81 = scmp.eq.s32.totalorder %s26, 3
    %p82 = por %p80, %p81
    %p83 = scmp.ne.s32.totalorder %s72, %s73
    %p84 = scmp.eq.s32.totalorder %s26, 0
    %p85 = por %p83, %p84
    %p86 = scmp.ne.s32.totalorder %s72, %s73
    %p87 = scmp.eq.s32.totalorder %s27, 3
    %p88 = por %p86, %p87
    %p90 = scmp.ne.s32.totalorder %s73, %s89
    %p91 = scmp.eq.s32.totalorder %s27, 0
    %p92 = por %p90, %p91
    %s93 = ssub.s32 %s29, %s36
    %p94 = scmp.eq.s32.totalorder %s93, 0
    %s96 = sadd.s32 %s95, 1
    %s97 = scalar_select %p94, %s95, %s96
    %p100 = pneg %p94
    %p101 = scmp.eq.s32.totalorder %s21, 3
    %p102 = por %p100, %p101
    %p103 = scmp.ne.s32.totalorder %s95, %s98
    %p104 = scmp.eq.s32.totalorder %s21, 0
    %p105 = por %p103, %p104
    %p106 = scmp.ne.s32.totalorder %s95, %s98
    %p107 = scmp.eq.s32.totalorder %s26, 3
    %p108 = por %p106, %p107
    %p109 = scmp.ne.s32.totalorder %s98, %s99
    %p110 = scmp.eq.s32.totalorder %s26, 0
    %p111 = por %p109, %p110
    %p112 = scmp.ne.s32.totalorder %s98, %s99
    %p113 = scmp.eq.s32.totalorder %s27, 3
    %p114 = por %p112, %p113
    %p116 = scmp.ne.s32.totalorder %s99, %s115
    %p117 = scmp.eq.s32.totalorder %s27, 0
    %p118 = por %p116, %p117
    %s119 = ssub.s32 %s29, %s36
    %p120 = scmp.eq.s32.totalorder %s119, 0
    %s122 = sadd.s32 %s121, 1
    %s123 = scalar_select %p120, %s121, %s122
    %p126 = pneg %p120
    %p127 = scmp.eq.s32.totalorder %s21, 3
    %p128 = por %p126, %p127
    %p129 = scmp.ne.s32.totalorder %s121, %s124
    %p130 = scmp.eq.s32.totalorder %s21, 0
    %p131 = por %p129, %p130
    %p132 = scmp.ne.s32.totalorder %s121, %s124
    %p133 = scmp.eq.s32.totalorder %s26, 3
    %p134 = por %p132, %p133
    %p135 = scmp.ne.s32.totalorder %s124, %s125
    %p136 = scmp.eq.s32.totalorder %s26, 0
    %p137 = por %p135, %p136
    %p138 = scmp.ne.s32.totalorder %s124, %s125
    %p139 = scmp.eq.s32.totalorder %s27, 3
    %p140 = por %p138, %p139
    %p142 = scmp.ne.s32.totalorder %s125, %s141
    %p143 = scmp.eq.s32.totalorder %s27, 0
    %p144 = por %p142, %p143
    %s145 = ssub.s32 %s29, %s36
    %p146 = scmp.eq.s32.totalorder %s145, 0
    %s148 = sadd.s32 %s147, 1
    %s149 = scalar_select %p146, %s147, %s148
    %p152 = pneg %p146
    %p153 = scmp.eq.s32.totalorder %s21, 3
    %p154 = por %p152, %p153
    %p155 = scmp.ne.s32.totalorder %s147, %s150
    %p156 = scmp.eq.s32.totalorder %s21, 0
    %p157 = por %p155, %p156
    %p158 = scmp.ne.s32.totalorder %s147, %s150
    %p159 = scmp.eq.s32.totalorder %s26, 3
    %p160 = por %p158, %p159
    %p161 = scmp.ne.s32.totalorder %s150, %s151
    %p162 = scmp.eq.s32.totalorder %s26, 0
    %p163 = por %p161, %p162
    %p164 = scmp.ne.s32.totalorder %s150, %s151
    %p165 = scmp.eq.s32.totalorder %s27, 3
    %p166 = por %p164, %p165
    %p168 = scmp.ne.s32.totalorder %s151, %s167
    %p169 = scmp.eq.s32.totalorder %s27, 0
    %p170 = por %p168, %p169
    %s171 = ssub.s32 %s29, %s36
    %p172 = scmp.eq.s32.totalorder %s171, 0
    %s174 = sadd.s32 %s173, 1
    %s175 = scalar_select %p172, %s173, %s174
    %p178 = pneg %p172
    %p179 = scmp.eq.s32.totalorder %s21, 3
    %p180 = por %p178, %p179
    %p181 = scmp.ne.s32.totalorder %s173, %s176
    %p182 = scmp.eq.s32.totalorder %s21, 0
    %p183 = por %p181, %p182
    %p184 = scmp.ne.s32.totalorder %s173, %s176
    %p185 = scmp.eq.s32.totalorder %s26, 3
    %p186 = por %p184, %p185
    %p187 = scmp.ne.s32.totalorder %s176, %s177
    %p188 = scmp.eq.s32.totalorder %s26, 0
    %p189 = por %p187, %p188
    %p190 = scmp.ne.s32.totalorder %s176, %s177
    %p191 = scmp.eq.s32.totalorder %s27, 3
    %p192 = por %p190, %p191
    %p194 = scmp.ne.s32.totalorder %s177, %s193
    %p195 = scmp.eq.s32.totalorder %s27, 0
    %p196 = por %p194, %p195
    %s197 = ssub.s32 %s29, %s36
    %p198 = scmp.eq.s32.totalorder %s197, 0
    %s200 = sadd.s32 %s199, 1
    %s201 = scalar_select %p198, %s199, %s200
    %p204 = pneg %p198
    %p205 = scmp.eq.s32.totalorder %s21, 3
    %p206 = por %p204, %p205
    %p207 = scmp.ne.s32.totalorder %s199, %s202
    %p208 = scmp.eq.s32.totalorder %s21, 0
    %p209 = por %p207, %p208
    %p210 = scmp.ne.s32.totalorder %s199, %s202
    %p211 = scmp.eq.s32.totalorder %s26, 3
    %p212 = por %p210, %p211
    %p213 = scmp.ne.s32.totalorder %s202, %s203
    %p214 = scmp.eq.s32.totalorder %s26, 0
    %p215 = por %p213, %p214
    %p216 = scmp.ne.s32.totalorder %s202, %s203
    %p217 = scmp.eq.s32.totalorder %s27, 3
    %p218 = por %p216, %p217
    %p220 = scmp.ne.s32.totalorder %s203, %s219
    %p221 = scmp.eq.s32.totalorder %s27, 0
    %p222 = por %p220, %p221
    %s223 = ssub.s32 %s29, %s36
    %p224 = scmp.eq.s32.totalorder %s223, 0
    %s226 = sadd.s32 %s225, 1
    %s227 = scalar_select %p224, %s225, %s226
    %p230 = pneg %p224
    %p231 = scmp.eq.s32.totalorder %s21, 3
    %p232 = por %p230, %p231
    %p233 = scmp.ne.s32.totalorder %s225, %s228
    %p234 = scmp.eq.s32.totalorder %s21, 0
    %p235 = por %p233, %p234
    %p236 = scmp.ne.s32.totalorder %s225, %s228
    %p237 = scmp.eq.s32.totalorder %s26, 3
    %p238 = por %p236, %p237
    %p239 = scmp.ne.s32.totalorder %s228, %s229
    %p240 = scmp.eq.s32.totalorder %s26, 0
    %p241 = por %p239, %p240
    %p242 = scmp.ne.s32.totalorder %s228, %s229
    %p243 = scmp.eq.s32.totalorder %s27, 3
    %p244 = por %p242, %p243
    %p246 = scmp.ne.s32.totalorder %s229, %s245
    %p247 = scmp.eq.s32.totalorder %s27, 0
    %p248 = por %p246, %p247
    %s249 = ssub.s32 %s29, %s36
    %p250 = scmp.eq.s32.totalorder %s249, 0
    %s252 = sadd.s32 %s251, 1
    %s253 = scalar_select %p250, %s251, %s252
    %p256 = pneg %p250
    %p257 = scmp.eq.s32.totalorder %s21, 3
    %p258 = por %p256, %p257
    %p259 = scmp.ne.s32.totalorder %s251, %s254
    %p260 = scmp.eq.s32.totalorder %s21, 0
    %p261 = por %p259, %p260
    %p262 = scmp.ne.s32.totalorder %s251, %s254
    %p263 = scmp.eq.s32.totalorder %s26, 3
    %p264 = por %p262, %p263
    %p265 = scmp.ne.s32.totalorder %s254, %s255
    %p266 = scmp.eq.s32.totalorder %s26, 0
    %p267 = por %p265, %p266
    %p268 = scmp.ne.s32.totalorder %s254, %s255
    %p269 = scmp.eq.s32.totalorder %s27, 3
    %p270 = por %p268, %p269
    %p272 = scmp.ne.s32.totalorder %s255, %s271
    %p273 = scmp.eq.s32.totalorder %s27, 0
    %p274 = por %p272, %p273
    %s275 = ssub.s32 %s29, %s36
    %p276 = scmp.eq.s32.totalorder %s275, 0
    %s278 = sadd.s32 %s277, 1
    %s279 = scalar_select %p276, %s277, %s278
    %p282 = pneg %p276
    %p283 = scmp.eq.s32.totalorder %s21, 3
    %p284 = por %p282, %p283
    %p285 = scmp.ne.s32.totalorder %s277, %s280
    %p286 = scmp.eq.s32.totalorder %s21, 0
    %p287 = por %p285, %p286
    %p288 = scmp.ne.s32.totalorder %s277, %s280
    %p289 = scmp.eq.s32.totalorder %s26, 3
    %p290 = por %p288, %p289
    %p291 = scmp.ne.s32.totalorder %s280, %s281
    %p292 = scmp.eq.s32.totalorder %s26, 0
    %p293 = por %p291, %p292
    %p294 = scmp.ne.s32.totalorder %s280, %s281
    %p295 = scmp.eq.s32.totalorder %s27, 3
    %p296 = por %p294, %p295
    %p298 = scmp.ne.s32.totalorder %s281, %s297
    %p299 = scmp.eq.s32.totalorder %s27, 0
    %p300 = por %p298, %p299
    %s301 = ssub.s32 %s29, %s36
    %p302 = scmp.eq.s32.totalorder %s301, 0
    %s304 = sadd.s32 %s303, 1
    %s305 = scalar_select %p302, %s303, %s304
    %p308 = pneg %p302
    %p309 = scmp.eq.s32.totalorder %s21, 3
    %p310 = por %p308, %p309
    %p311 = scmp.ne.s32.totalorder %s303, %s306
    %p312 = scmp.eq.s32.totalorder %s21, 0
    %p313 = por %p311, %p312
    %p314 = scmp.ne.s32.totalorder %s303, %s306
    %p315 = scmp.eq.s32.totalorder %s26, 3
    %p316 = por %p314, %p315
    %p317 = scmp.ne.s32.totalorder %s306, %s307
    %p318 = scmp.eq.s32.totalorder %s26, 0
    %p319 = por %p317, %p318
    %p320 = scmp.ne.s32.totalorder %s306, %s307
    %p321 = scmp.eq.s32.totalorder %s27, 3
    %p322 = por %p320, %p321
    %p324 = scmp.ne.s32.totalorder %s307, %s323
    %p325 = scmp.eq.s32.totalorder %s27, 0
    %p326 = por %p324, %p325
    %s327 = ssub.s32 %s29, %s36
    %p328 = scmp.eq.s32.totalorder %s327, 0
    %s330 = sadd.s32 %s329, 1
    %s331 = scalar_select %p328, %s329, %s330
    %p334 = pneg %p328
    %p335 = scmp.eq.s32.totalorder %s21, 3
    %p336 = por %p334, %p335
    %p337 = scmp.ne.s32.totalorder %s329, %s332
    %p338 = scmp.eq.s32.totalorder %s21, 0
    %p339 = por %p337, %p338
    %p340 = scmp.ne.s32.totalorder %s329, %s332
    %p341 = scmp.eq.s32.totalorder %s26, 3
    %p342 = por %p340, %p341
    %p343 = scmp.ne.s32.totalorder %s332, %s333
    %p344 = scmp.eq.s32.totalorder %s26, 0
    %p345 = por %p343, %p344
    %p346 = scmp.ne.s32.totalorder %s332, %s333
    %p347 = scmp.eq.s32.totalorder %s27, 3
    %p348 = por %p346, %p347
    %p350 = scmp.ne.s32.totalorder %s333, %s349
    %p351 = scmp.eq.s32.totalorder %s27, 0
    %p352 = por %p350, %p351
    %s353 = ssub.s32 %s29, %s36
    %p354 = scmp.eq.s32.totalorder %s353, 0
    %s356 = sadd.s32 %s355, 1
    %s357 = scalar_select %p354, %s355, %s356
    %p360 = pneg %p354
    %p361 = scmp.eq.s32.totalorder %s21, 3
    %p362 = por %p360, %p361
    %p363 = scmp.ne.s32.totalorder %s355, %s358
    %p364 = scmp.eq.s32.totalorder %s21, 0
    %p365 = por %p363, %p364
    %p366 = scmp.ne.s32.totalorder %s355, %s358
    %p367 = scmp.eq.s32.totalorder %s26, 3
    %p368 = por %p366, %p367
    %p369 = scmp.ne.s32.totalorder %s358, %s359
    %p370 = scmp.eq.s32.totalorder %s26, 0
    %p371 = por %p369, %p370
    %p372 = scmp.ne.s32.totalorder %s358, %s359
    %p373 = scmp.eq.s32.totalorder %s27, 3
    %p374 = por %p372, %p373
    %p376 = scmp.ne.s32.totalorder %s359, %s375
    %p377 = scmp.eq.s32.totalorder %s27, 0
    %p378 = por %p376, %p377
    %s379 = ssub.s32 %s29, %s36
    %p380 = scmp.eq.s32.totalorder %s379, 0
    %s382 = sadd.s32 %s381, 1
    %s383 = scalar_select %p380, %s381, %s382
    %p386 = pneg %p380
    %p387 = scmp.eq.s32.totalorder %s21, 3
    %p388 = por %p386, %p387
    %p389 = scmp.ne.s32.totalorder %s381, %s384
    %p390 = scmp.eq.s32.totalorder %s21, 0
    %p391 = por %p389, %p390
    %p392 = scmp.ne.s32.totalorder %s381, %s384
    %p393 = scmp.eq.s32.totalorder %s26, 3
    %p394 = por %p392, %p393
    %p395 = scmp.ne.s32.totalorder %s384, %s385
    %p396 = scmp.eq.s32.totalorder %s26, 0
    %p397 = por %p395, %p396
    %p398 = scmp.ne.s32.totalorder %s384, %s385
    %p399 = scmp.eq.s32.totalorder %s27, 3
    %p400 = por %p398, %p399
    %p402 = scmp.ne.s32.totalorder %s385, %s401
    %p403 = scmp.eq.s32.totalorder %s27, 0
    %p404 = por %p402, %p403
    %s405 = ssub.s32 %s29, %s36
    %p406 = scmp.eq.s32.totalorder %s405, 0
    %s408 = sadd.s32 %s407, 1
    %s409 = scalar_select %p406, %s407, %s408
    %p412 = pneg %p406
    %p413 = scmp.eq.s32.totalorder %s21, 3
    %p414 = por %p412, %p413
    %p415 = scmp.ne.s32.totalorder %s407, %s410
    %p416 = scmp.eq.s32.totalorder %s21, 0
    %p417 = por %p415, %p416
    %p418 = scmp.ne.s32.totalorder %s407, %s410
    %p419 = scmp.eq.s32.totalorder %s26, 3
    %p420 = por %p418, %p419
    %p421 = scmp.ne.s32.totalorder %s410, %s411
    %p422 = scmp.eq.s32.totalorder %s26, 0
    %p423 = por %p421, %p422
    %p424 = scmp.ne.s32.totalorder %s410, %s411
    %p425 = scmp.eq.s32.totalorder %s27, 3
    %p426 = por %p424, %p425
    %p428 = scmp.ne.s32.totalorder %s411, %s427
    %p429 = scmp.eq.s32.totalorder %s27, 0
    %p430 = por %p428, %p429
    %s431 = ssub.s32 %s28, %s40
    %p432 = scmp.eq.s32.totalorder %s431, 0
    %s434 = sadd.s32 %s433, 1
    %s435 = scalar_select %p432, %s433, %s434
    %p438 = pneg %p432
    %p439 = scmp.eq.s32.totalorder %s21, 3
    %p440 = por %p438, %p439
    %p441 = scmp.ne.s32.totalorder %s433, %s436
    %p442 = scmp.eq.s32.totalorder %s21, 0
    %p443 = por %p441, %p442
    %p444 = scmp.ne.s32.totalorder %s433, %s436
    %p445 = scmp.eq.s32.totalorder %s26, 3
    %p446 = por %p444, %p445
    %p447 = scmp.ne.s32.totalorder %s436, %s437
    %p448 = scmp.eq.s32.totalorder %s26, 0
    %p449 = por %p447, %p448
    %p450 = scmp.ne.s32.totalorder %s436, %s437
    %p451 = scmp.eq.s32.totalorder %s27, 3
    %p452 = por %p450, %p451
    %p454 = scmp.ne.s32.totalorder %s437, %s453
    %p455 = scmp.eq.s32.totalorder %s27, 0
    %p456 = por %p454, %p455
    %p457 = scmp.le.s32.totalorder 1, %s21
    %p458 = scmp.lt.s32.totalorder %s21, 5
    %p459 = pnand %p457, %p458
    %p460 = pneg %p459
    // Predicated region
    $region9: #{tpu_custom_call.1} parent=5 // pred_check
      _
    $region10: #{tpu_custom_call.1} parent=5 // pred_check_branch
      %462 = sbr.rel (%p459) target = $region12
    $region11: #{tpu_custom_call.1} parent=5 // pred_region
      %s463 = ssub.s32 %s21, 1
    $region12: #{tpu_custom_call.1} parent=5 // pred_fallthru
      _
    %p464 = scmp.lt.s32.totalorder %s21, 4
    // Predicated region
    $region13: #{tpu_custom_call.1} parent=5 // pred_check
      %p465 = pneg %p464
    $region14: #{tpu_custom_call.1} parent=5 // pred_check_branch
      %467 = sbr.rel (%p465) target = $region16
    $region15: #{tpu_custom_call.1} parent=5 // pred_region
      // Predicated region
      $region17: #{tpu_custom_call.1} parent=15 // pred_check
        %p468 = pneg %p53
      $region18: #{tpu_custom_call.1} parent=15 // pred_check_branch
        %470 = sbr.rel (%p468) target = $region20
      $region19: #{tpu_custom_call.1} parent=15 // pred_region
        %p471 = scmp.lt.s32.totalorder %s28, 1
        %s472 = scalar_select %p471, %s28, 1
        %s473 = smul.addr %s472, 2
        %s474 = smul.addr %s473, 8
        %s475 = scalar_lea.vmem %s0, %s474
      $region20: #{tpu_custom_call.1} parent=15 // pred_fallthru
        _
      // Predicated region
      $region21: #{tpu_custom_call.1} parent=15 // pred_check
        %p476 = pneg %p79
      $region22: #{tpu_custom_call.1} parent=15 // pred_check_branch
        %478 = sbr.rel (%p476) target = $region24
      $region23: #{tpu_custom_call.1} parent=15 // pred_region
        %p479 = scmp.lt.s32.totalorder %s29, 1
        %s480 = scalar_select %p479, %s29, 1
        %s481 = scalar_lea.vmem %s1, %s480
      $region24: #{tpu_custom_call.1} parent=15 // pred_fallthru
        _
      // Predicated region
      $region25: #{tpu_custom_call.1} parent=15 // pred_check
        %p482 = pneg %p105
      $region26: #{tpu_custom_call.1} parent=15 // pred_check_branch
        %484 = sbr.rel (%p482) target = $region28
      $region27: #{tpu_custom_call.1} parent=15 // pred_region
        %p485 = scmp.lt.s32.totalorder %s29, 1
        %s486 = scalar_select %p485, %s29, 1
        %s487 = scalar_lea.vmem %s2, %s486
      $region28: #{tpu_custom_call.1} parent=15 // pred_fallthru
        _
      // Predicated region
      $region29: #{tpu_custom_call.1} parent=15 // pred_check
        %p488 = pneg %p131
      $region30: #{tpu_custom_call.1} parent=15 // pred_check_branch
        %490 = sbr.rel (%p488) target = $region32
      $region31: #{tpu_custom_call.1} parent=15 // pred_region
        %p491 = scmp.lt.s32.totalorder %s29, 1
        %s492 = scalar_select %p491, %s29, 1
        %s493 = smul.addr %s492, 8
        %s494 = smul.addr %s493, 8
        %s495 = scalar_lea.vmem %s3, %s494
      $region32: #{tpu_custom_call.1} parent=15 // pred_fallthru
        _
      // Predicated region
      $region33: #{tpu_custom_call.1} parent=15 // pred_check
        %p496 = pneg %p157
      $region34: #{tpu_custom_call.1} parent=15 // pred_check_branch
        %498 = sbr.rel (%p496) target = $region36
      $region35: #{tpu_custom_call.1} parent=15 // pred_region
        %p499 = scmp.lt.s32.totalorder %s29, 1
        %s500 = scalar_select %p499, %s29, 1
        %s501 = smul.addr %s500, 4
        %s502 = scalar_lea.vmem %s4, %s501
      $region36: #{tpu_custom_call.1} parent=15 // pred_fallthru
        _
      // Predicated region
      $region37: #{tpu_custom_call.1} parent=15 // pred_check
        %p503 = pneg %p183
      $region38: #{tpu_custom_call.1} parent=15 // pred_check_branch
        %505 = sbr.rel (%p503) target = $region40
      $region39: #{tpu_custom_call.1} parent=15 // pred_region
        %p506 = scmp.lt.s32.totalorder %s29, 1
        %s507 = scalar_select %p506, %s29, 1
        %s508 = scalar_lea.vmem %s5, %s507
      $region40: #{tpu_custom_call.1} parent=15 // pred_fallthru
        _
      // Predicated region
      $region41: #{tpu_custom_call.1} parent=15 // pred_check
        %p509 = pneg %p209
      $region42: #{tpu_custom_call.1} parent=15 // pred_check_branch
        %511 = sbr.rel (%p509) target = $region44
      $region43: #{tpu_custom_call.1} parent=15 // pred_region
        %p512 = scmp.lt.s32.totalorder %s29, 1
        %s513 = scalar_select %p512, %s29, 1
        %s514 = scalar_lea.vmem %s6, %s513
      $region44: #{tpu_custom_call.1} parent=15 // pred_fallthru
        _
      // Predicated region
      $region45: #{tpu_custom_call.1} parent=15 // pred_check
        %p515 = pneg %p235
      $region46: #{tpu_custom_call.1} parent=15 // pred_check_branch
        %517 = sbr.rel (%p515) target = $region48
      $region47: #{tpu_custom_call.1} parent=15 // pred_region
        %p518 = scmp.lt.s32.totalorder %s29, 1
        %s519 = scalar_select %p518, %s29, 1
        %s520 = scalar_lea.vmem %s7, %s519
      $region48: #{tpu_custom_call.1} parent=15 // pred_fallthru
        _
      // Predicated region
      $region49: #{tpu_custom_call.1} parent=15 // pred_check
        %p521 = pneg %p261
      $region50: #{tpu_custom_call.1} parent=15 // pred_check_branch
        %523 = sbr.rel (%p521) target = $region52
      $region51: #{tpu_custom_call.1} parent=15 // pred_region
        %p524 = scmp.lt.s32.totalorder %s29, 1
        %s525 = scalar_select %p524, %s29, 1
        %s526 = scalar_lea.vmem %s8, %s525
      $region52: #{tpu_custom_call.1} parent=15 // pred_fallthru
        _
      // Predicated region
      $region53: #{tpu_custom_call.1} parent=15 // pred_check
        %p527 = pneg %p287
      $region54: #{tpu_custom_call.1} parent=15 // pred_check_branch
        %529 = sbr.rel (%p527) target = $region56
      $region55: #{tpu_custom_call.1} parent=15 // pred_region
        %p530 = scmp.lt.s32.totalorder %s29, 1
        %s531 = scalar_select %p530, %s29, 1
        %s532 = scalar_lea.vmem %s9, %s531
      $region56: #{tpu_custom_call.1} parent=15 // pred_fallthru
        _
      // Predicated region
      $region57: #{tpu_custom_call.1} parent=15 // pred_check
        %p533 = pneg %p313
      $region58: #{tpu_custom_call.1} parent=15 // pred_check_branch
        %535 = sbr.rel (%p533) target = $region60
      $region59: #{tpu_custom_call.1} parent=15 // pred_region
        %p536 = scmp.lt.s32.totalorder %s29, 1
        %s537 = scalar_select %p536, %s29, 1
        %s538 = smul.addr %s537, 8
        %s539 = smul.addr %s538, 8
        %s540 = scalar_lea.vmem %s10, %s539
      $region60: #{tpu_custom_call.1} parent=15 // pred_fallthru
        _
      // Predicated region
      $region61: #{tpu_custom_call.1} parent=15 // pred_check
        %p541 = pneg %p339
      $region62: #{tpu_custom_call.1} parent=15 // pred_check_branch
        %543 = sbr.rel (%p541) target = $region64
      $region63: #{tpu_custom_call.1} parent=15 // pred_region
        %p544 = scmp.lt.s32.totalorder %s29, 1
        %s545 = scalar_select %p544, %s29, 1
        %s546 = smul.addr %s545, 4
        %s547 = smul.addr %s546, 8
        %s548 = scalar_lea.vmem %s11, %s547
      $region64: #{tpu_custom_call.1} parent=15 // pred_fallthru
        _
      // Predicated region
      $region65: #{tpu_custom_call.1} parent=15 // pred_check
        %p549 = pneg %p365
      $region66: #{tpu_custom_call.1} parent=15 // pred_check_branch
        %551 = sbr.rel (%p549) target = $region68
      $region67: #{tpu_custom_call.1} parent=15 // pred_region
        %p552 = scmp.lt.s32.totalorder %s29, 1
        %s553 = scalar_select %p552, %s29, 1
        %s554 = scalar_lea.vmem %s12, %s553
      $region68: #{tpu_custom_call.1} parent=15 // pred_fallthru
        _
      // Predicated region
      $region69: #{tpu_custom_call.1} parent=15 // pred_check
        %p555 = pneg %p391
      $region70: #{tpu_custom_call.1} parent=15 // pred_check_branch
        %557 = sbr.rel (%p555) target = $region72
      $region71: #{tpu_custom_call.1} parent=15 // pred_region
        %p558 = scmp.lt.s32.totalorder %s29, 1
        %s559 = scalar_select %p558, %s29, 1
        %s560 = smul.addr %s559, 16
        %s561 = smul.addr %s560, 8
        %s562 = scalar_lea.vmem %s13, %s561
      $region72: #{tpu_custom_call.1} parent=15 // pred_fallthru
        _
      // Predicated region
      $region73: #{tpu_custom_call.1} parent=15 // pred_check
        %p563 = pneg %p417
      $region74: #{tpu_custom_call.1} parent=15 // pred_check_branch
        %565 = sbr.rel (%p563) target = $region76
      $region75: #{tpu_custom_call.1} parent=15 // pred_region
        %p566 = scmp.lt.s32.totalorder %s29, 1
        %s567 = scalar_select %p566, %s29, 1
        %s568 = scalar_lea.vmem %s14, %s567
      $region76: #{tpu_custom_call.1} parent=15 // pred_fallthru
        _
    $region16: #{tpu_custom_call.1} parent=5 // pred_fallthru
      _
    %p569 = scmp.le.s32.totalorder 1, %s21
    %p570 = scmp.lt.s32.totalorder %s21, 5
    %p571 = pnand %p569, %p570
    %p572 = pneg %p571
    // Predicated region
    $region77: #{tpu_custom_call.1} parent=5 // pred_check
      _
    $region78: #{tpu_custom_call.1} parent=5 // pred_check_branch
      %574 = sbr.rel (%p571) target = $region80
    $region79: #{tpu_custom_call.1} parent=5 // pred_region
      %s575 = ssub.s32 %s21, 1
      %p576 = scmp.lt.s32.totalorder %s30, 1
      %s577 = scalar_select %p576, %s30, 1
      %s578 = smul.addr %s577, 2
      %s579 = smul.addr %s578, 8
      %s580 = scalar_lea.vmem %s0, %s579
      %p581 = pneg %p59
      %p582 = pneg %p56
      %p583 = scmp.lt.s32.totalorder %s31, 1
      %s584 = scalar_select %p583, %s31, 1
      %s585 = scalar_lea.vmem %s1, %s584
      %p586 = pneg %p85
      %p587 = pneg %p82
      %p588 = scmp.lt.s32.totalorder %s31, 1
      %s589 = scalar_select %p588, %s31, 1
      %s590 = scalar_lea.vmem %s2, %s589
      %p591 = pneg %p111
      %p592 = pneg %p108
      %p593 = scmp.lt.s32.totalorder %s31, 1
      %s594 = scalar_select %p593, %s31, 1
      %s595 = smul.addr %s594, 8
      %s596 = smul.addr %s595, 8
      %s597 = scalar_lea.vmem %s3, %s596
      %p598 = pneg %p137
      %p599 = pneg %p134
      %p600 = scmp.lt.s32.totalorder %s31, 1
      %s601 = scalar_select %p600, %s31, 1
      %s602 = smul.addr %s601, 4
      %s603 = scalar_lea.vmem %s4, %s602
      %p604 = pneg %p163
      %p605 = pneg %p160
      %p606 = scmp.lt.s32.totalorder %s31, 1
      %s607 = scalar_select %p606, %s31, 1
      %s608 = scalar_lea.vmem %s5, %s607
      %p609 = pneg %p189
      %p610 = pneg %p186
      %p611 = scmp.lt.s32.totalorder %s31, 1
      %s612 = scalar_select %p611, %s31, 1
      %s613 = scalar_lea.vmem %s6, %s612
      %p614 = pneg %p215
      %p615 = pneg %p212
      %p616 = scmp.lt.s32.totalorder %s31, 1
      %s617 = scalar_select %p616, %s31, 1
      %s618 = scalar_lea.vmem %s7, %s617
      %p619 = pneg %p241
      %p620 = pneg %p238
      %p621 = scmp.lt.s32.totalorder %s31, 1
      %s622 = scalar_select %p621, %s31, 1
      %s623 = scalar_lea.vmem %s8, %s622
      %p624 = pneg %p267
      %p625 = pneg %p264
      %p626 = scmp.lt.s32.totalorder %s31, 1
      %s627 = scalar_select %p626, %s31, 1
      %s628 = scalar_lea.vmem %s9, %s627
      %p629 = pneg %p293
      %p630 = pneg %p290
      %p631 = scmp.lt.s32.totalorder %s31, 1
      %s632 = scalar_select %p631, %s31, 1
      %s633 = smul.addr %s632, 8
      %s634 = smul.addr %s633, 8
      %s635 = scalar_lea.vmem %s10, %s634
      %p636 = pneg %p319
      %p637 = pneg %p316
      %p638 = scmp.lt.s32.totalorder %s31, 1
      %s639 = scalar_select %p638, %s31, 1
      %s640 = smul.addr %s639, 4
      %s641 = smul.addr %s640, 8
      %s642 = scalar_lea.vmem %s11, %s641
      %p643 = pneg %p345
      %p644 = pneg %p342
      %p645 = scmp.lt.s32.totalorder %s31, 1
      %s646 = scalar_select %p645, %s31, 1
      %s647 = scalar_lea.vmem %s12, %s646
      %p648 = pneg %p371
      %p649 = pneg %p368
      %p650 = scmp.lt.s32.totalorder %s31, 1
      %s651 = scalar_select %p650, %s31, 1
      %s652 = smul.addr %s651, 16
      %s653 = smul.addr %s652, 8
      %s654 = scalar_lea.vmem %s13, %s653
      %p655 = pneg %p397
      %p656 = pneg %p394
      %p657 = scmp.lt.s32.totalorder %s31, 1
      %s658 = scalar_select %p657, %s31, 1
      %s659 = scalar_lea.vmem %s14, %s658
      %p660 = pneg %p423
      %p661 = pneg %p420
      %p662 = pneg %p449
      %p663 = pneg %p446
      %p664 = scmp.lt.s32.totalorder %s30, 1
      %s665 = scalar_select %p664, %s30, 1
      %s666 = smul.addr %s665, 2
      %s667 = smul.addr %s666, 8
      %s668 = scalar_lea.vmem %s15, %s667
      %p669 = scmp.lt.s32.totalorder %s30, 1
      %s670 = scalar_select %p669, %s30, 1
      %s671 = smul.addr %s670, 2
      %s672 = smul.addr %s671, 8
      %s673 = scalar_lea.vmem %s0, %s672
      %p674 = scmp.lt.s32.totalorder %s31, 1
      %s675 = scalar_select %p674, %s31, 1
      %s676 = scalar_lea.vmem %s1, %s675
      %p677 = scmp.lt.s32.totalorder %s31, 1
      %s678 = scalar_select %p677, %s31, 1
      %s679 = scalar_lea.vmem %s2, %s678
      %p680 = scmp.lt.s32.totalorder %s31, 1
      %s681 = scalar_select %p680, %s31, 1
      %s682 = smul.addr %s681, 8
      %s683 = smul.addr %s682, 8
      %s684 = scalar_lea.vmem %s3, %s683
      %p685 = scmp.lt.s32.totalorder %s31, 1
      %s686 = scalar_select %p685, %s31, 1
      %s687 = smul.addr %s686, 4
      %s688 = scalar_lea.vmem %s4, %s687
      %p689 = scmp.lt.s32.totalorder %s31, 1
      %s690 = scalar_select %p689, %s31, 1
      %s691 = scalar_lea.vmem %s5, %s690
      %p692 = scmp.lt.s32.totalorder %s31, 1
      %s693 = scalar_select %p692, %s31, 1
      %s694 = scalar_lea.vmem %s6, %s693
      %p695 = scmp.lt.s32.totalorder %s31, 1
      %s696 = scalar_select %p695, %s31, 1
      %s697 = scalar_lea.vmem %s7, %s696
      %p698 = scmp.lt.s32.totalorder %s31, 1
      %s699 = scalar_select %p698, %s31, 1
      %s700 = scalar_lea.vmem %s8, %s699
      %p701 = scmp.lt.s32.totalorder %s31, 1
      %s702 = scalar_select %p701, %s31, 1
      %s703 = scalar_lea.vmem %s9, %s702
      %p704 = scmp.lt.s32.totalorder %s31, 1
      %s705 = scalar_select %p704, %s31, 1
      %s706 = smul.addr %s705, 8
      %s707 = smul.addr %s706, 8
      %s708 = scalar_lea.vmem %s10, %s707
      %p709 = scmp.lt.s32.totalorder %s31, 1
      %s710 = scalar_select %p709, %s31, 1
      %s711 = smul.addr %s710, 4
      %s712 = smul.addr %s711, 8
      %s713 = scalar_lea.vmem %s11, %s712
      %p714 = scmp.lt.s32.totalorder %s31, 1
      %s715 = scalar_select %p714, %s31, 1
      %s716 = scalar_lea.vmem %s12, %s715
      %p717 = scmp.lt.s32.totalorder %s31, 1
      %s718 = scalar_select %p717, %s31, 1
      %s719 = smul.addr %s718, 16
      %s720 = smul.addr %s719, 8
      %s721 = scalar_lea.vmem %s13, %s720
      %p722 = scmp.lt.s32.totalorder %s31, 1
      %s723 = scalar_select %p722, %s31, 1
      %s724 = scalar_lea.vmem %s14, %s723
      %p725 = scmp.lt.s32.totalorder %s30, 1
      %s726 = scalar_select %p725, %s30, 1
      %s727 = smul.addr %s726, 2
      %s728 = smul.addr %s727, 8
      %s729 = scalar_lea.vmem %s15, %s728
      %p731 = scmp.eq.s32.totalorder %s31, 0
      // Predicated region
      $region81: #{tpu_custom_call.1} parent=79 // pred_check
        %p732 = pneg %p731
      $region82: #{tpu_custom_call.1} parent=79 // pred_check_branch
        %734 = sbr.rel (%p732) target = $region84
      $region83: #{tpu_custom_call.1} parent=79 // pred_region
        %v735 = vld [vmem:[%s673] sm:$0xff]
        %v736 = vld [vmem:[%s673 + $0x8] sm:$0x1]
        %vm737 = vcmask 261120
        %738 = vst.msk [vmem:[%s729] sm:$0xff] %vm737, %v735
        %vm739 = vcmask 253952
        %740 = vst.msk [vmem:[%s729 + $0x8] sm:$0x1] %vm739, %v736
      $region84: #{tpu_custom_call.1} parent=79 // pred_fallthru
        _
      %v741 = vld [vmem:[%s729] sm:$0xff]
      %v742 = vld [vmem:[%s729 + $0x8] sm:$0x1]
      %v743 = vld [vmem:[%s676] sm:$0x1]
      %v744 = vmul.f32 %v741, %v741
      %v745 = vmul.f32 %v742, %v742
      %vm746 = vcmask 261120
      %v747 = vsel %vm746, %v744, 0.0
      %748 = vadd.xlane.f32.xlu0 %v747
      %v749 = vpop.xlane.xlu0 %748
      %vm750 = vcmask 253952
      %v751 = vsel %vm750, %v745, 0.0
      %752 = vadd.xlane.f32.xlu0 %v751
      %v753 = vpop.xlane.xlu0 %752
      %v754 = vrcp.pop 32.0
      %v755 = vmul.f32 %v749, %v754
      %v756 = vmul.f32 %v753, %v754
      %v757 = vadd.f32 %v755, 1e-06
      %v758 = vadd.f32 %v756, 1e-06
      %v759 = vrsqrt.pop %v757
      %v760 = vrsqrt.pop %v758
      %v761 = vmul.f32 %v741, %v759
      %v762 = vmul.f32 %v742, %v760
      %v764 = vlaneseq
      %v765 = vshrl.u32 %v764, 7
      %v766 = vsub.s32 0, %v765
      %v767 = vrot.slane %v743, %v766
      %v769 = vmul.f32 %v761, %v767
      %v770 = vmul.f32 %v762, %v767
      %v771 = vld [vmem:[%s684] sm:$0xff]
      %v772 = vld [vmem:[%s684 + $0x8] sm:$0xff]
      %v773 = vld [vmem:[%s684 + $0x10] sm:$0xff]
      %v774 = vld [vmem:[%s684 + $0x18] sm:$0xff]
      %v775 = vld [vmem:[%s684 + $0x20] sm:$0xff]
      %v776 = vld [vmem:[%s684 + $0x28] sm:$0xff]
      %v777 = vld [vmem:[%s684 + $0x30] sm:$0xff]
      %v778 = vld [vmem:[%s684 + $0x38] sm:$0xff]
      %v779 = vpack.c.bf16 %v770, %v769
      %v780 = vpack.c.bf16 %v773, %v771
      %v781 = vpack.c.bf16 %v774, %v772
      %v782 = vpack.c.bf16 %v777, %v775
      %v783 = vpack.c.bf16 %v778, %v776
      %v785 = vsel %vm746, %v779, 0
      %787 = vmatprep.subr.bf16.mxu0 %v781
      %788 = vmatpush1.bf16.msra.mxu0 %v780
      %789 = vmatprep.subr.bf16.mxu0 %v783
      %790 = vmatpush1.bf16.msra.mxu0 %v782
      %791 = vmatprep.subr.bf16.mxu0 0
      %792 = vmatpush1.bf16.msra.mxu0 0
      %793 = vmatprep.subr.bf16.mxu0 0
      %794 = vmatpush1.bf16.msra.mxu0 0
      %795 = vmatprep.subr.bf16.mxu0 0
      %796 = vmatpush1.bf16.msra.mxu0 0
      %797 = vmatprep.subr.bf16.mxu0 0
      %798 = vmatpush1.bf16.msra.mxu0 0
      %799 = vmatprep.subr.bf16.mxu0 0
      %800 = vmatpush1.bf16.msra.mxu0 0
      %801 = vmatprep.subr.bf16.mxu0 0
      %802 = vmatpush1.bf16.msra.mxu0 0
      %803 = vmatprep.subr.bf16.mxu0 0
      %804 = vmatpush1.bf16.msra.mxu0 0
      %805 = vmatprep.subr.bf16.mxu0 0
      %806 = vmatpush1.bf16.msra.mxu0 0
      %807 = vmatprep.subr.bf16.mxu0 0
      %808 = vmatpush1.bf16.msra.mxu0 0
      %809 = vmatprep.subr.bf16.mxu0 0
      %810 = vmatpush1.bf16.msra.mxu0 0
      %811 = vmatprep.subr.bf16.mxu0 0
      %812 = vmatpush1.bf16.msra.mxu0 0
      %813 = vmatprep.subr.bf16.mxu0 0
      %814 = vmatpush1.bf16.msra.mxu0 0
      %815 = vmatprep.subr.bf16.mxu0 0
      %816 = vmatpush1.bf16.msra.mxu0 0
      %817 = vmatprep.subr.bf16.mxu0 0
      %818 = vmatpush1.bf16.msra.mxu0 0
      %819 = vmatprep.mubr.bf16.mxu0 0
      %820 = vmatmul.mubr.bf16.gmra.mrb[0].mxu0 %v785
      %v821 = vpop.f32.mrb[0].mxu0
      %v822 = vadd.f32 0.0, %v821
      %v823 = vpop.f32.mrb[0].mxu0
      %v824 = vadd.f32 0.0, %v823
      %v825 = vpop.f32.mrb[0].mxu0
      %v826 = vadd.f32 0.0, %v825
      %v827 = vpop.f32.mrb[0].mxu0
      %v828 = vadd.f32 0.0, %v827
      %829 = vdwg.mxu0
      %v830 = vld [vmem:[%s691] sm:$0x1]
      %v831 = vld [vmem:[%s688 + $0x3] sm:$0x1]
      %v832 = vlaneseq
      %v833 = vshrl.u32 %v832, 7
      %v834 = vsub.s32 0, %v833
      %v835 = vrot.slane %v831, %v834
      %840 = vrot.lane.b32.xlu0 %v822, 64
      %v841 = vpop.permute.xlu0 %840
      %842 = vrot.lane.b32.xlu0 %v824, 64
      %v843 = vpop.permute.xlu0 %842
      %844 = vrot.lane.b32.xlu0 %v826, 64
      %v845 = vpop.permute.xlu0 %844
      %846 = vrot.lane.b32.xlu0 %v828, 64
      %v847 = vpop.permute.xlu0 %846
      %vm848 = vcmask 523264
      %v849 = vsel %vm848, %v841, %v843
      %v850 = vsel %vm848, %v845, %v847
      %v853 = vmul.f32 %v835, %v849
      %v854 = vmul.f32 %v835, %v850
      %v856 = vlaneseq
      %v857 = vshrl.u32 %v856, 7
      %v858 = vsub.s32 0, %v857
      %v859 = vrot.slane %v830, %v858
      %v861 = vadd.f32 %v859, %v853
      %v862 = vadd.f32 %v859, %v854
      %v863 = vrot.slane %v822, 5
      %v864 = vrot.slane %v824, 5
      %865 = vrot.lane.b32.xlu0 %v863, 64
      %v866 = vpop.permute.xlu0 %865
      %867 = vrot.lane.b32.xlu0 %v864, 64
      %v868 = vpop.permute.xlu0 %867
      %v869 = vsel %vm848, %v866, %v868
      %vm871 = vcmask 1042432
      %v872 = vsel %vm871, 0.0, %v869
      %v873 = vld [vmem:[%s688] sm:$0x1]
      %v874 = vlaneseq
      %v875 = vshrl.u32 %v874, 7
      %v876 = vsub.s32 0, %v875
      %v877 = vrot.slane %v873, %v876
      %v878 = vmul.f32 %v877, %v872
      %v879 = vmul.f32 %v877, %v869
      %v880 = vadd.f32 %v861, %v878
      %v881 = vadd.f32 %v862, %v879
      %v882 = vrot.slane %v822, 6
      %v883 = vrot.slane %v824, 6
      %884 = vrot.lane.b32.xlu0 %v882, 64
      %v885 = vpop.permute.xlu0 %884
      %886 = vrot.lane.b32.xlu0 %v883, 64
      %v887 = vpop.permute.xlu0 %886
      %v888 = vsel %vm848, %v885, %v887
      %vm890 = vcmask 1041408
      %v891 = vsel %vm890, 0.0, %v888
      %v892 = vld [vmem:[%s688 + $0x1] sm:$0x1]
      %v893 = vlaneseq
      %v894 = vshrl.u32 %v893, 7
      %v895 = vsub.s32 0, %v894
      %v896 = vrot.slane %v892, %v895
      %v897 = vmul.f32 %v896, %v891
      %v898 = vmul.f32 %v896, %v888
      %v899 = vadd.f32 %v880, %v897
      %v900 = vadd.f32 %v881, %v898
      %v901 = vrot.slane %v822, 7
      %v902 = vrot.slane %v824, 7
      %903 = vrot.lane.b32.xlu0 %v901, 64
      %v904 = vpop.permute.xlu0 %903
      %905 = vrot.lane.b32.xlu0 %v902, 64
      %v906 = vpop.permute.xlu0 %905
      %v907 = vsel %vm848, %v904, %v906
      %vm909 = vcmask 1040384
      %v910 = vsel %vm909, 0.0, %v907
      %v911 = vld [vmem:[%s688 + $0x2] sm:$0x1]
      %v912 = vlaneseq
      %v913 = vshrl.u32 %v912, 7
      %v914 = vsub.s32 0, %v913
      %v915 = vrot.slane %v911, %v914
      %v916 = vmul.f32 %v915, %v910
      %v917 = vmul.f32 %v915, %v907
      %v918 = vadd.f32 %v899, %v916
      %v919 = vadd.f32 %v900, %v917
      %v920 = vxor.u32 %v918, 2147483648
      %v921 = vxor.u32 %v919, 2147483648
      %v922 = vmul.f32 %v920, 1.442695
      %v923 = vpow.pop %v922
      %v924 = vmul.f32 %v921, 1.442695
      %v925 = vpow.pop %v924
      %v926 = vadd.f32 %v923, 1.0
      %v927 = vadd.f32 %v925, 1.0
      %v928 = vrcp.pop %v926
      %v929 = vmul.f32 1.0, %v928
      %v930 = vrcp.pop %v927
      %v931 = vmul.f32 1.0, %v930
      %v932 = vmul.f32 %v918, %v929
      %v933 = vmul.f32 %v919, %v931
      %v934 = vld [vmem:[%s697] sm:$0x1]
      %v936 = vlaneseq
      %v937 = vshrl.u32 %v936, 7
      %v938 = vsub.s32 0, %v937
      %v939 = vrot.slane %v934, %v938
      %940 = vrot.lane.b32.xlu0 %v939, 64
      %v941 = vpop.permute.xlu0 %940
      %v943 = vadd.f32 %v824, %v941
      %v944 = vadd.f32 %v828, %v941
      %vm945 = vcmp.gt.f32.partialorder %v943, 20.0
      %vm946 = vcmp.gt.f32.partialorder %v944, 20.0
      %v947 = vmin.f32 %v943, 20.0
      %v948 = vmin.f32 %v944, 20.0
      %v949 = vmul.f32 %v947, 1.442695
      %v950 = vpow.pop %v949
      %v951 = vmul.f32 %v948, 1.442695
      %v952 = vpow.pop %v951
      %v953 = vadd.f32 %v950, 1.0
      %v954 = vlog2.pop %v953
      %v955 = vmul.f32 %v954, 0.6931472
      %v956 = vmul.f32 -0.5, %v950
      %v957 = vadd.f32 %v956, 1.0
      %v958 = vmul.f32 %v957, %v950
      %v959 = vand.u32 2147483647, %v950
      %vm960 = vcmp.lt.f32.partialorder %v959, 0.0004427343
      %v961 = vsel %vm960, %v958, %v955
      %v962 = vadd.f32 %v952, 1.0
      %v963 = vlog2.pop %v962
      %v964 = vmul.f32 %v963, 0.6931472
      %v965 = vmul.f32 -0.5, %v952
      %v966 = vadd.f32 %v965, 1.0
      %v967 = vmul.f32 %v966, %v952
      %v968 = vand.u32 2147483647, %v952
      %vm969 = vcmp.lt.f32.partialorder %v968, 0.0004427343
      %v970 = vsel %vm969, %v967, %v964
      %v971 = vsel %vm945, %v943, %v961
      %v972 = vsel %vm946, %v944, %v970
      %v973 = vld [vmem:[%s694] sm:$0x1]
      %v974 = vmul.f32 %v973, 1.442695
      %v975 = vpow.pop %v974
      %v976 = vsub.f32 0.0, %v975
      %v978 = vlaneseq
      %v979 = vshrl.u32 %v978, 7
      %v980 = vsub.s32 0, %v979
      %v981 = vrot.slane %v976, %v980
      %982 = vrot.lane.b32.xlu0 %v981, 64
      %v983 = vpop.permute.xlu0 %982
      %v985 = vmul.f32 %v971, %v983
      %v986 = vmul.f32 %v972, %v983
      %v987 = vlaneseq
      %v988 = vshrl.u32 %v987, 7
      %v989 = vadd.s32 %v988, 8
      %v990 = vlaneseq
      %v991 = vand.u32 %v990, 127
      %vm992 = vcmp.ge.s32.totalorder %v988, %v991
      %vm993 = vcmp.ge.s32.totalorder %v989, %v991
      %v994 = vsel %vm992, 1, 0
      %v995 = vsel %vm993, 1, 0
      %v996 = vcvt.s32.f32 %v994
      %v997 = vcvt.s32.f32 %v995
      %1000 = vrot.lane.b32.xlu0 %v985, 64
      %v1001 = vpop.permute.xlu0 %1000
      %1002 = vrot.lane.b32.xlu0 %v986, 64
      %v1003 = vpop.permute.xlu0 %1002
      %vm1005 = vcmask 72704
      %v1007 = vsel %vm1005, %v996, 0
      %v1010 = vsel %vm1005, %v997, 0
      %v1012 = vsel %vm909, %v1003, 0
      %1014 = vmatprep.subr.mxu0 0.0
      %1015 = vmatpush1.msra.mxu0 %v1001
      %1016 = vmatprep.subr.mxu0 0.0
      %1017 = vmatpush1.msra.mxu0 %v1012
      %1018 = vmatprep.subr.mxu0 0.0
      %1019 = vmatpush1.msra.mxu0 0.0
      %1020 = vmatprep.subr.mxu0 0.0
      %1021 = vmatpush1.msra.mxu0 0.0
      %1022 = vmatprep.subr.mxu0 0.0
      %1023 = vmatpush1.msra.mxu0 0.0
      %1024 = vmatprep.subr.mxu0 0.0
      %1025 = vmatpush1.msra.mxu0 0.0
      %1026 = vmatprep.subr.mxu0 0.0
      %1027 = vmatpush1.msra.mxu0 0.0
      %1028 = vmatprep.subr.mxu0 0.0
      %1029 = vmatpush1.msra.mxu0 0.0
      %1030 = vmatprep.subr.mxu0 0.0
      %1031 = vmatpush1.msra.mxu0 0.0
      %1032 = vmatprep.subr.mxu0 0.0
      %1033 = vmatpush1.msra.mxu0 0.0
      %1034 = vmatprep.subr.mxu0 0.0
      %1035 = vmatpush1.msra.mxu0 0.0
      %1036 = vmatprep.subr.mxu0 0.0
      %1037 = vmatpush1.msra.mxu0 0.0
      %1038 = vmatprep.subr.mxu0 0.0
      %1039 = vmatpush1.msra.mxu0 0.0
      %1040 = vmatprep.subr.mxu0 0.0
      %1041 = vmatpush1.msra.mxu0 0.0
      %1042 = vmatprep.subr.mxu0 0.0
      %1043 = vmatpush1.msra.mxu0 0.0
      %1044 = vmatprep.subr.mxu0 0.0
      %1045 = vmatpush1.msra.mxu0 0.0
      %1046 = vmatprep.subr.mxu0 0.0
      %1047 = vmatpush1.msra.mxu0 0.0
      %1048 = vmatprep.subr.mxu0 0.0
      %1049 = vmatpush1.msra.mxu0 0.0
      %1050 = vmatprep.subr.mxu0 0.0
      %1051 = vmatpush1.msra.mxu0 0.0
      %1052 = vmatprep.subr.mxu0 0.0
      %1053 = vmatpush1.msra.mxu0 0.0
      %1054 = vmatprep.subr.mxu0 0.0
      %1055 = vmatpush1.msra.mxu0 0.0
      %1056 = vmatprep.subr.mxu0 0.0
      %1057 = vmatpush1.msra.mxu0 0.0
      %1058 = vmatprep.subr.mxu0 0.0
      %1059 = vmatpush1.msra.mxu0 0.0
      %1060 = vmatprep.subr.mxu0 0.0
      %1061 = vmatpush1.msra.mxu0 0.0
      %1062 = vmatprep.subr.mxu0 0.0
      %1063 = vmatpush1.msra.mxu0 0.0
      %1064 = vmatprep.subr.mxu0 0.0
      %1065 = vmatpush1.msra.mxu0 0.0
      %1066 = vmatprep.subr.mxu0 0.0
      %1067 = vmatpush1.msra.mxu0 0.0
      %1068 = vmatprep.subr.mxu0 0.0
      %1069 = vmatpush1.msra.mxu0 0.0
      %1070 = vmatprep.subr.mxu0 0.0
      %1071 = vmatpush1.msra.mxu0 0.0
      %1072 = vmatprep.subr.mxu0 0.0
      %1073 = vmatpush1.msra.mxu0 0.0
      %1074 = vmatprep.subr.mxu0 0.0
      %1075 = vmatpush1.msra.mxu0 0.0
      %1076 = vmatprep.subr.mxu0 0.0
      %1077 = vmatpush1.msra.mxu0 0.0
      %1078 = vmatprep.mubr.f32.mxu0 0.0
      %1079 = vmatmul.mubr.f32.gmra.mrb[0].mxu0 %v1007
      %v1080 = vpop.f32.mrb[0].mxu0
      %v1081 = vadd.f32 0.0, %v1080
      %v1082 = vpop.f32.mrb[0].mxu0
      %1083 = vmatprep.mubr.f32.mxu0 0.0
      %1084 = vmatmul.mubr.f32.gmra.mrb[0].mxu0 %v1010
      %v1085 = vpop.f32.mrb[0].mxu0
      %v1086 = vadd.f32 0.0, %v1085
      %v1087 = vpop.f32.mrb[0].mxu0
      %1088 = vdwg.mxu0
      %1089 = vxpose.xlu0.b32.start [1/16] %v1081, 128
      %1090 = vxpose.xlu0.b32.cont [2/16] %v1086, 128
      %1091 = vxpose.xlu0.b32.cont [3/16] 0.0, 128
      %1092 = vxpose.xlu0.b32.cont [4/16] 0.0, 128
      %1093 = vxpose.xlu0.b32.cont [5/16] 0.0, 128
      %1094 = vxpose.xlu0.b32.cont [6/16] 0.0, 128
      %1095 = vxpose.xlu0.b32.cont [7/16] 0.0, 128
      %1096 = vxpose.xlu0.b32.cont [8/16] 0.0, 128
      %1097 = vxpose.xlu0.b32.cont [9/16] 0.0, 128
      %1098 = vxpose.xlu0.b32.cont [10/16] 0.0, 128
      %1099 = vxpose.xlu0.b32.cont [11/16] 0.0, 128
      %1100 = vxpose.xlu0.b32.cont [12/16] 0.0, 128
      %1101 = vxpose.xlu0.b32.cont [13/16] 0.0, 128
      %1102 = vxpose.xlu0.b32.cont [14/16] 0.0, 128
      %1103 = vxpose.xlu0.b32.cont [15/16] 0.0, 128
      %1104 = vxpose.xlu0.b32.end [16/16] 0.0, 128
      %v1105 = vpop.trf.xlu0
      %v1106 = vpop.trf.xlu0
      %v1107 = vpop.trf.xlu0
      %v1108 = vpop.trf.xlu0
      %v1109 = vpop.trf.xlu0
      %v1110 = vpop.trf.xlu0
      %v1111 = vpop.trf.xlu0
      %v1112 = vpop.trf.xlu0
      %v1113 = vpop.trf.xlu0
      %v1114 = vpop.trf.xlu0
      %v1115 = vpop.trf.xlu0
      %v1116 = vpop.trf.xlu0
      %v1117 = vpop.trf.xlu0
      %v1118 = vpop.trf.xlu0
      %v1119 = vpop.trf.xlu0
      %v1120 = vpop.trf.xlu0
      %v1121 = vpack.c.bf16 %v933, %v932
      %1124 = vrot.lane.b32.xlu0 %v932, 64
      %v1125 = vpop.permute.xlu0 %1124
      %1126 = vrot.lane.b32.xlu0 %v933, 64
      %v1127 = vpop.permute.xlu0 %1126
      %1130 = vxpose.xlu0.b32.start [1/16] %v1125, 128
      %1131 = vxpose.xlu0.b32.cont [2/16] %v1127, 128
      %1132 = vxpose.xlu0.b32.cont [3/16] 0.0, 128
      %1133 = vxpose.xlu0.b32.cont [4/16] 0.0, 128
      %1134 = vxpose.xlu0.b32.cont [5/16] 0.0, 128
      %1135 = vxpose.xlu0.b32.cont [6/16] 0.0, 128
      %1136 = vxpose.xlu0.b32.cont [7/16] 0.0, 128
      %1137 = vxpose.xlu0.b32.cont [8/16] 0.0, 128
      %1138 = vxpose.xlu0.b32.cont [9/16] 0.0, 128
      %1139 = vxpose.xlu0.b32.cont [10/16] 0.0, 128
      %1140 = vxpose.xlu0.b32.cont [11/16] 0.0, 128
      %1141 = vxpose.xlu0.b32.cont [12/16] 0.0, 128
      %1142 = vxpose.xlu0.b32.cont [13/16] 0.0, 128
      %1143 = vxpose.xlu0.b32.cont [14/16] 0.0, 128
      %1144 = vxpose.xlu0.b32.cont [15/16] 0.0, 128
      %1145 = vxpose.xlu0.b32.end [16/16] 0.0, 128
      %v1146 = vpop.trf.xlu0
      %v1147 = vpop.trf.xlu0
      %v1148 = vpop.trf.xlu0
      %v1149 = vpop.trf.xlu0
      %v1150 = vpop.trf.xlu0
      %v1151 = vpop.trf.xlu0
      %v1152 = vpop.trf.xlu0
      %v1153 = vpop.trf.xlu0
      %v1154 = vpop.trf.xlu0
      %v1155 = vpop.trf.xlu0
      %v1156 = vpop.trf.xlu0
      %v1157 = vpop.trf.xlu0
      %v1158 = vpop.trf.xlu0
      %v1159 = vpop.trf.xlu0
      %v1160 = vpop.trf.xlu0
      %v1161 = vpop.trf.xlu0
      %v1162 = vpack.c.bf16 %v1147, %v1146
      %v1163 = vpack.c.bf16 %v1149, %v1148
      %1165 = vrot.lane.b32.xlu0 %v1121, 32
      %v1166 = vpop.permute.xlu0 %1165
      %v1168 = vsel %vm746, %v1166, 0
      %1170 = vmatprep.subr.bf16.mxu0 0
      %1171 = vmatpush1.bf16.msra.mxu0 %v1162
      %1172 = vmatprep.subr.bf16.mxu0 0
      %1173 = vmatpush1.bf16.msra.mxu0 %v1163
      %1174 = vmatprep.subr.bf16.mxu0 0
      %1175 = vmatpush1.bf16.msra.mxu0 0
      %1176 = vmatprep.subr.bf16.mxu0 0
      %1177 = vmatpush1.bf16.msra.mxu0 0
      %1178 = vmatprep.subr.bf16.mxu0 0
      %1179 = vmatpush1.bf16.msra.mxu0 0
      %1180 = vmatprep.subr.bf16.mxu0 0
      %1181 = vmatpush1.bf16.msra.mxu0 0
      %1182 = vmatprep.subr.bf16.mxu0 0
      %1183 = vmatpush1.bf16.msra.mxu0 0
      %1184 = vmatprep.subr.bf16.mxu0 0
      %1185 = vmatpush1.bf16.msra.mxu0 0
      %1186 = vmatprep.subr.bf16.mxu0 0
      %1187 = vmatpush1.bf16.msra.mxu0 0
      %1188 = vmatprep.subr.bf16.mxu0 0
      %1189 = vmatpush1.bf16.msra.mxu0 0
      %1190 = vmatprep.subr.bf16.mxu0 0
      %1191 = vmatpush1.bf16.msra.mxu0 0
      %1192 = vmatprep.subr.bf16.mxu0 0
      %1193 = vmatpush1.bf16.msra.mxu0 0
      %1194 = vmatprep.subr.bf16.mxu0 0
      %1195 = vmatpush1.bf16.msra.mxu0 0
      %1196 = vmatprep.subr.bf16.mxu0 0
      %1197 = vmatpush1.bf16.msra.mxu0 0
      %1198 = vmatprep.subr.bf16.mxu0 0
      %1199 = vmatpush1.bf16.msra.mxu0 0
      %1200 = vmatprep.subr.bf16.mxu0 0
      %1201 = vmatpush1.bf16.msra.mxu0 0
      %1202 = vmatprep.mubr.bf16.mxu0 0
      %1203 = vmatmul.mubr.bf16.gmra.mrb[0].mxu0 %v1168
      %v1204 = vpop.f32.mrb[0].mxu0
      %v1205 = vadd.f32 0.0, %v1204
      %v1206 = vpop.f32.mrb[0].mxu0
      %v1207 = vpop.f32.mrb[0].mxu0
      %v1208 = vadd.f32 0.0, %v1207
      %v1209 = vpop.f32.mrb[0].mxu0
      %1210 = vdwg.mxu0
      %1212 = vset.pattern.permute.xlu0 0
      %1213 = vperm.xlu0 %1212, %v1081
      %v1214 = vpop.permute.xlu0 %1213
      %1217 = vset.pattern.permute.xlu0 0
      %1218 = vperm.xlu0 %1217, %v1086
      %v1219 = vpop.permute.xlu0 %1218
      %v1221 = vlaneseq
      %v1222 = vshrl.u32 %v1221, 7
      %v1223 = vsub.s32 0, %v1222
      %v1224 = vrot.slane %v1105, %v1223
      %v1225 = vsub.f32 %v1214, %v1224
      %v1226 = vsub.f32 %v1219, %v1224
      %v1227 = vmin.f32 %v1225, 0.0
      %v1228 = vmin.f32 %v1226, 0.0
      %v1229 = vmul.f32 %v1227, 1.442695
      %v1230 = vpow.pop %v1229
      %v1231 = vmul.f32 %v1228, 1.442695
      %v1232 = vpow.pop %v1231
      %v1233 = vmul.f32 %v996, %v1230
      %v1234 = vmul.f32 %v997, %v1232
      %v1235 = vmul.f32 %v1205, %v1233
      %v1236 = vmul.f32 %v1208, %v1234
      %v1237 = vpack.c.bf16 %v1236, %v1235
      %1239 = vset.pattern.permute.xlu0 64
      %1240 = vperm.xlu0 %1239, %v971
      %v1241 = vpop.permute.xlu0 %1240
      %1244 = vset.pattern.permute.xlu0 64
      %1245 = vperm.xlu0 %1244, %v972
      %v1246 = vpop.permute.xlu0 %1245
      %v1248 = vmul.f32 %v1241, %v932
      %v1249 = vmul.f32 %v1246, %v933
      %v1250 = vpack.c.bf16 %v1249, %v1248
      %v1252 = vsel %vm1005, %v1237, 0
      %vm1254 = vcmask 1043456
      %vm1255 = vcmask 1044480
      %v1256 = vsel %vm1254, 4294967295, 65535
      %v1257 = vsel %vm1255, %v1256, 0
      %v1259 = vand.u32 %v1250, %v1257
      %1261 = vmatprep.subr.bf16.mxu0 0
      %1262 = vmatpush1.bf16.msra.mxu0 %v1259
      %1263 = vmatprep.subr.bf16.mxu0 0
      %1264 = vmatpush1.bf16.msra.mxu0 0
      %1265 = vmatprep.subr.bf16.mxu0 0
      %1266 = vmatpush1.bf16.msra.mxu0 0
      %1267 = vmatprep.subr.bf16.mxu0 0
      %1268 = vmatpush1.bf16.msra.mxu0 0
      %1269 = vmatprep.subr.bf16.mxu0 0
      %1270 = vmatpush1.bf16.msra.mxu0 0
      %1271 = vmatprep.subr.bf16.mxu0 0
      %1272 = vmatpush1.bf16.msra.mxu0 0
      %1273 = vmatprep.subr.bf16.mxu0 0
      %1274 = vmatpush1.bf16.msra.mxu0 0
      %1275 = vmatprep.subr.bf16.mxu0 0
      %1276 = vmatpush1.bf16.msra.mxu0 0
      %1277 = vmatprep.subr.bf16.mxu0 0
      %1278 = vmatpush1.bf16.msra.mxu0 0
      %1279 = vmatprep.subr.bf16.mxu0 0
      %1280 = vmatpush1.bf16.msra.mxu0 0
      %1281 = vmatprep.subr.bf16.mxu0 0
      %1282 = vmatpush1.bf16.msra.mxu0 0
      %1283 = vmatprep.subr.bf16.mxu0 0
      %1284 = vmatpush1.bf16.msra.mxu0 0
      %1285 = vmatprep.subr.bf16.mxu0 0
      %1286 = vmatpush1.bf16.msra.mxu0 0
      %1287 = vmatprep.subr.bf16.mxu0 0
      %1288 = vmatpush1.bf16.msra.mxu0 0
      %1289 = vmatprep.subr.bf16.mxu0 0
      %1290 = vmatpush1.bf16.msra.mxu0 0
      %1291 = vmatprep.subr.bf16.mxu0 0
      %1292 = vmatpush1.bf16.msra.mxu0 0
      %1293 = vmatprep.mubr.bf16.mxu0 0
      %1294 = vmatmul.mubr.bf16.gmra.mrb[0].mxu0 %v1252
      %v1295 = vpop.f32.mrb[0].mxu0
      %v1296 = vadd.f32 0.0, %v1295
      %v1297 = vpop.f32.mrb[0].mxu0
      %v1298 = vpop.f32.mrb[0].mxu0
      %v1299 = vadd.f32 0.0, %v1298
      %v1300 = vpop.f32.mrb[0].mxu0
      %1301 = vdwg.mxu0
      %1302 = vset.pattern.permute.xlu0 1
      %1303 = vperm.xlu0 %1302, %v1081
      %v1304 = vpop.permute.xlu0 %1303
      %1306 = vset.pattern.permute.xlu0 1
      %1307 = vperm.xlu0 %1306, %v1086
      %v1308 = vpop.permute.xlu0 %1307
      %v1310 = vlaneseq
      %v1311 = vshrl.u32 %v1310, 7
      %v1312 = vsub.s32 1, %v1311
      %v1313 = vrot.slane %v1105, %v1312
      %v1314 = vsub.f32 %v1304, %v1313
      %v1315 = vsub.f32 %v1308, %v1313
      %v1316 = vmin.f32 %v1314, 0.0
      %v1317 = vmin.f32 %v1315, 0.0
      %v1318 = vmul.f32 %v1316, 1.442695
      %v1319 = vpow.pop %v1318
      %v1320 = vmul.f32 %v1317, 1.442695
      %v1321 = vpow.pop %v1320
      %v1322 = vmul.f32 %v996, %v1319
      %v1323 = vmul.f32 %v997, %v1321
      %v1324 = vmul.f32 %v1205, %v1322
      %v1325 = vmul.f32 %v1208, %v1323
      %v1326 = vpack.c.bf16 %v1325, %v1324
      %1327 = vset.pattern.permute.xlu0 65
      %1328 = vperm.xlu0 %1327, %v971
      %v1329 = vpop.permute.xlu0 %1328
      %1331 = vset.pattern.permute.xlu0 65
      %1332 = vperm.xlu0 %1331, %v972
      %v1333 = vpop.permute.xlu0 %1332
      %v1335 = vmul.f32 %v1329, %v932
      %v1336 = vmul.f32 %v1333, %v933
      %v1337 = vpack.c.bf16 %v1336, %v1335
      %1339 = vrot.lane.b32.xlu0 %v1337, 112
      %v1340 = vpop.permute.xlu0 %1339
      %v1342 = vsel %vm1005, %v1326, 0
      %v1345 = vand.u32 %v1340, %v1257
      %1347 = vmatprep.subr.bf16.mxu0 0
      %1348 = vmatpush1.bf16.msra.mxu0 %v1345
      %1349 = vmatprep.subr.bf16.mxu0 0
      %1350 = vmatpush1.bf16.msra.mxu0 0
      %1351 = vmatprep.subr.bf16.mxu0 0
      %1352 = vmatpush1.bf16.msra.mxu0 0
      %1353 = vmatprep.subr.bf16.mxu0 0
      %1354 = vmatpush1.bf16.msra.mxu0 0
      %1355 = vmatprep.subr.bf16.mxu0 0
      %1356 = vmatpush1.bf16.msra.mxu0 0
      %1357 = vmatprep.subr.bf16.mxu0 0
      %1358 = vmatpush1.bf16.msra.mxu0 0
      %1359 = vmatprep.subr.bf16.mxu0 0
      %1360 = vmatpush1.bf16.msra.mxu0 0
      %1361 = vmatprep.subr.bf16.mxu0 0
      %1362 = vmatpush1.bf16.msra.mxu0 0
      %1363 = vmatprep.subr.bf16.mxu0 0
      %1364 = vmatpush1.bf16.msra.mxu0 0
      %1365 = vmatprep.subr.bf16.mxu0 0
      %1366 = vmatpush1.bf16.msra.mxu0 0
      %1367 = vmatprep.subr.bf16.mxu0 0
      %1368 = vmatpush1.bf16.msra.mxu0 0
      %1369 = vmatprep.subr.bf16.mxu0 0
      %1370 = vmatpush1.bf16.msra.mxu0 0
      %1371 = vmatprep.subr.bf16.mxu0 0
      %1372 = vmatpush1.bf16.msra.mxu0 0
      %1373 = vmatprep.subr.bf16.mxu0 0
      %1374 = vmatpush1.bf16.msra.mxu0 0
      %1375 = vmatprep.subr.bf16.mxu0 0
      %1376 = vmatpush1.bf16.msra.mxu0 0
      %1377 = vmatprep.subr.bf16.mxu0 0
      %1378 = vmatpush1.bf16.msra.mxu0 0
      %1379 = vmatprep.mubr.bf16.mxu0 0
      %1380 = vmatmul.mubr.bf16.gmra.mrb[0].mxu0 %v1342
      %v1381 = vpop.f32.mrb[0].mxu0
      %v1382 = vadd.f32 0.0, %v1381
      %v1383 = vpop.f32.mrb[0].mxu0
      %v1384 = vpop.f32.mrb[0].mxu0
      %v1385 = vadd.f32 0.0, %v1384
      %v1386 = vpop.f32.mrb[0].mxu0
      %1387 = vdwg.mxu0
      %1388 = vset.pattern.permute.xlu0 2
      %1389 = vperm.xlu0 %1388, %v1081
      %v1390 = vpop.permute.xlu0 %1389
      %1392 = vset.pattern.permute.xlu0 2
      %1393 = vperm.xlu0 %1392, %v1086
      %v1394 = vpop.permute.xlu0 %1393
      %v1396 = vlaneseq
      %v1397 = vshrl.u32 %v1396, 7
      %v1398 = vsub.s32 2, %v1397
      %v1399 = vrot.slane %v1105, %v1398
      %v1400 = vsub.f32 %v1390, %v1399
      %v1401 = vsub.f32 %v1394, %v1399
      %v1402 = vmin.f32 %v1400, 0.0
      %v1403 = vmin.f32 %v1401, 0.0
      %v1404 = vmul.f32 %v1402, 1.442695
      %v1405 = vpow.pop %v1404
      %v1406 = vmul.f32 %v1403, 1.442695
      %v1407 = vpow.pop %v1406
      %v1408 = vmul.f32 %v996, %v1405
      %v1409 = vmul.f32 %v997, %v1407
      %v1410 = vmul.f32 %v1205, %v1408
      %v1411 = vmul.f32 %v1208, %v1409
      %v1412 = vpack.c.bf16 %v1411, %v1410
      %1413 = vset.pattern.permute.xlu0 66
      %1414 = vperm.xlu0 %1413, %v971
      %v1415 = vpop.permute.xlu0 %1414
      %1417 = vset.pattern.permute.xlu0 66
      %1418 = vperm.xlu0 %1417, %v972
      %v1419 = vpop.permute.xlu0 %1418
      %v1421 = vmul.f32 %v1415, %v932
      %v1422 = vmul.f32 %v1419, %v933
      %v1423 = vpack.c.bf16 %v1422, %v1421
      %1425 = vrot.lane.b32.xlu0 %v1423, 96
      %v1426 = vpop.permute.xlu0 %1425
      %v1428 = vsel %vm1005, %v1412, 0
      %v1431 = vand.u32 %v1426, %v1257
      %1433 = vmatprep.subr.bf16.mxu0 0
      %1434 = vmatpush1.bf16.msra.mxu0 %v1431
      %1435 = vmatprep.subr.bf16.mxu0 0
      %1436 = vmatpush1.bf16.msra.mxu0 0
      %1437 = vmatprep.subr.bf16.mxu0 0
      %1438 = vmatpush1.bf16.msra.mxu0 0
      %1439 = vmatprep.subr.bf16.mxu0 0
      %1440 = vmatpush1.bf16.msra.mxu0 0
      %1441 = vmatprep.subr.bf16.mxu0 0
      %1442 = vmatpush1.bf16.msra.mxu0 0
      %1443 = vmatprep.subr.bf16.mxu0 0
      %1444 = vmatpush1.bf16.msra.mxu0 0
      %1445 = vmatprep.subr.bf16.mxu0 0
      %1446 = vmatpush1.bf16.msra.mxu0 0
      %1447 = vmatprep.subr.bf16.mxu0 0
      %1448 = vmatpush1.bf16.msra.mxu0 0
      %1449 = vmatprep.subr.bf16.mxu0 0
      %1450 = vmatpush1.bf16.msra.mxu0 0
      %1451 = vmatprep.subr.bf16.mxu0 0
      %1452 = vmatpush1.bf16.msra.mxu0 0
      %1453 = vmatprep.subr.bf16.mxu0 0
      %1454 = vmatpush1.bf16.msra.mxu0 0
      %1455 = vmatprep.subr.bf16.mxu0 0
      %1456 = vmatpush1.bf16.msra.mxu0 0
      %1457 = vmatprep.subr.bf16.mxu0 0
      %1458 = vmatpush1.bf16.msra.mxu0 0
      %1459 = vmatprep.subr.bf16.mxu0 0
      %1460 = vmatpush1.bf16.msra.mxu0 0
      %1461 = vmatprep.subr.bf16.mxu0 0
      %1462 = vmatpush1.bf16.msra.mxu0 0
      %1463 = vmatprep.subr.bf16.mxu0 0
      %1464 = vmatpush1.bf16.msra.mxu0 0
      %1465 = vmatprep.mubr.bf16.mxu0 0
      %1466 = vmatmul.mubr.bf16.gmra.mrb[0].mxu0 %v1428
      %v1467 = vpop.f32.mrb[0].mxu0
      %v1468 = vadd.f32 0.0, %v1467
      %v1469 = vpop.f32.mrb[0].mxu0
      %v1470 = vpop.f32.mrb[0].mxu0
      %v1471 = vadd.f32 0.0, %v1470
      %v1472 = vpop.f32.mrb[0].mxu0
      %1473 = vdwg.mxu0
      %1474 = vset.pattern.permute.xlu0 3
      %1475 = vperm.xlu0 %1474, %v1081
      %v1476 = vpop.permute.xlu0 %1475
      %1478 = vset.pattern.permute.xlu0 3
      %1479 = vperm.xlu0 %1478, %v1086
      %v1480 = vpop.permute.xlu0 %1479
      %v1482 = vlaneseq
      %v1483 = vshrl.u32 %v1482, 7
      %v1484 = vsub.s32 3, %v1483
      %v1485 = vrot.slane %v1105, %v1484
      %v1486 = vsub.f32 %v1476, %v1485
      %v1487 = vsub.f32 %v1480, %v1485
      %v1488 = vmin.f32 %v1486, 0.0
      %v1489 = vmin.f32 %v1487, 0.0
      %v1490 = vmul.f32 %v1488, 1.442695
      %v1491 = vpow.pop %v1490
      %v1492 = vmul.f32 %v1489, 1.442695
      %v1493 = vpow.pop %v1492
      %v1494 = vmul.f32 %v996, %v1491
      %v1495 = vmul.f32 %v997, %v1493
      %v1496 = vmul.f32 %v1205, %v1494
      %v1497 = vmul.f32 %v1208, %v1495
      %v1498 = vpack.c.bf16 %v1497, %v1496
      %1499 = vset.pattern.permute.xlu0 67
      %1500 = vperm.xlu0 %1499, %v971
      %v1501 = vpop.permute.xlu0 %1500
      %1503 = vset.pattern.permute.xlu0 67
      %1504 = vperm.xlu0 %1503, %v972
      %v1505 = vpop.permute.xlu0 %1504
      %v1507 = vmul.f32 %v1501, %v932
      %v1508 = vmul.f32 %v1505, %v933
      %v1509 = vpack.c.bf16 %v1508, %v1507
      %1511 = vrot.lane.b32.xlu0 %v1509, 80
      %v1512 = vpop.permute.xlu0 %1511
      %v1514 = vsel %vm1005, %v1498, 0
      %v1517 = vand.u32 %v1512, %v1257
      %1519 = vmatprep.subr.bf16.mxu0 0
      %1520 = vmatpush1.bf16.msra.mxu0 %v1517
      %1521 = vmatprep.subr.bf16.mxu0 0
      %1522 = vmatpush1.bf16.msra.mxu0 0
      %1523 = vmatprep.subr.bf16.mxu0 0
      %1524 = vmatpush1.bf16.msra.mxu0 0
      %1525 = vmatprep.subr.bf16.mxu0 0
      %1526 = vmatpush1.bf16.msra.mxu0 0
      %1527 = vmatprep.subr.bf16.mxu0 0
      %1528 = vmatpush1.bf16.msra.mxu0 0
      %1529 = vmatprep.subr.bf16.mxu0 0
      %1530 = vmatpush1.bf16.msra.mxu0 0
      %1531 = vmatprep.subr.bf16.mxu0 0
      %1532 = vmatpush1.bf16.msra.mxu0 0
      %1533 = vmatprep.subr.bf16.mxu0 0
      %1534 = vmatpush1.bf16.msra.mxu0 0
      %1535 = vmatprep.subr.bf16.mxu0 0
      %1536 = vmatpush1.bf16.msra.mxu0 0
      %1537 = vmatprep.subr.bf16.mxu0 0
      %1538 = vmatpush1.bf16.msra.mxu0 0
      %1539 = vmatprep.subr.bf16.mxu0 0
      %1540 = vmatpush1.bf16.msra.mxu0 0
      %1541 = vmatprep.subr.bf16.mxu0 0
      %1542 = vmatpush1.bf16.msra.mxu0 0
      %1543 = vmatprep.subr.bf16.mxu0 0
      %1544 = vmatpush1.bf16.msra.mxu0 0
      %1545 = vmatprep.subr.bf16.mxu0 0
      %1546 = vmatpush1.bf16.msra.mxu0 0
      %1547 = vmatprep.subr.bf16.mxu0 0
      %1548 = vmatpush1.bf16.msra.mxu0 0
      %1549 = vmatprep.subr.bf16.mxu0 0
      %1550 = vmatpush1.bf16.msra.mxu0 0
      %1551 = vmatprep.mubr.bf16.mxu0 0
      %1552 = vmatmul.mubr.bf16.gmra.mrb[0].mxu0 %v1514
      %v1553 = vpop.f32.mrb[0].mxu0
      %v1554 = vadd.f32 0.0, %v1553
      %v1555 = vpop.f32.mrb[0].mxu0
      %v1556 = vpop.f32.mrb[0].mxu0
      %v1557 = vadd.f32 0.0, %v1556
      %v1558 = vpop.f32.mrb[0].mxu0
      %1559 = vdwg.mxu0
      %1562 = vrot.lane.b32.xlu0 %v1382, 16
      %v1563 = vpop.permute.xlu0 %1562
      %1564 = vrot.lane.b32.xlu0 %v1385, 16
      %v1565 = vpop.permute.xlu0 %1564
      %1570 = vrot.lane.b32.xlu0 %v1468, 32
      %v1571 = vpop.permute.xlu0 %1570
      %1572 = vrot.lane.b32.xlu0 %v1471, 32
      %v1573 = vpop.permute.xlu0 %1572
      %1578 = vrot.lane.b32.xlu0 %v1554, 48
      %v1579 = vpop.permute.xlu0 %1578
      %1580 = vrot.lane.b32.xlu0 %v1557, 48
      %v1581 = vpop.permute.xlu0 %1580
      %vm1584 = vcmask 130048
      %v1585 = vsel %vm1584, %v1296, %v1563
      %v1586 = vsel %vm1584, %v1299, %v1565
      %v1587 = vsel %vm746, %v1585, %v1571
      %v1588 = vsel %vm746, %v1586, %v1573
      %vm1589 = vcmask 392192
      %v1590 = vsel %vm1589, %v1587, %v1579
      %v1591 = vsel %vm1589, %v1588, %v1581
      %v1592 = vld [vmem:[%s700] sm:$0x1]
      %v1594 = vlaneseq
      %v1595 = vshrl.u32 %v1594, 7
      %v1596 = vsub.s32 0, %v1595
      %v1597 = vrot.slane %v1592, %v1596
      %v1599 = vmul.f32 %v932, %v1597
      %v1600 = vmul.f32 %v933, %v1597
      %v1601 = vadd.f32 %v1590, %v1599
      %v1602 = vadd.f32 %v1591, %v1600
      %v1603 = vxor.u32 %v822, 2147483648
      %v1604 = vxor.u32 %v826, 2147483648
      %v1605 = vmul.f32 %v1603, 1.442695
      %v1606 = vpow.pop %v1605
      %v1607 = vmul.f32 %v1604, 1.442695
      %v1608 = vpow.pop %v1607
      %v1609 = vadd.f32 %v1606, 1.0
      %v1610 = vadd.f32 %v1608, 1.0
      %v1611 = vrcp.pop %v1609
      %v1612 = vmul.f32 1.0, %v1611
      %v1613 = vrcp.pop %v1610
      %v1614 = vmul.f32 1.0, %v1613
      %v1615 = vmul.f32 %v822, %v1612
      %v1616 = vmul.f32 %v826, %v1614
      %v1617 = vmul.f32 %v1601, %v1615
      %v1618 = vmul.f32 %v1602, %v1616
      %v1619 = vld [vmem:[%s703] sm:$0x1]
      %v1620 = vmul.f32 %v1617, %v1617
      %v1621 = vmul.f32 %v1618, %v1618
      %v1622 = vsel %vm848, %v1620, 0.0
      %1623 = vadd.xlane.f32.xlu0 %v1622
      %v1624 = vpop.xlane.xlu0 %1623
      %vm1625 = vcmask 516096
      %v1626 = vsel %vm1625, %v1621, 0.0
      %1627 = vadd.xlane.f32.xlu0 %v1626
      %v1628 = vpop.xlane.xlu0 %1627
      %v1629 = vrcp.pop 64.0
      %v1630 = vmul.f32 %v1624, %v1629
      %v1631 = vmul.f32 %v1628, %v1629
      %v1632 = vadd.f32 %v1630, 1e-05
      %v1633 = vadd.f32 %v1631, 1e-05
      %v1634 = vrsqrt.pop %v1632
      %v1635 = vrsqrt.pop %v1633
      %v1636 = vmul.f32 %v1617, %v1634
      %v1637 = vmul.f32 %v1618, %v1635
      %v1639 = vlaneseq
      %v1640 = vshrl.u32 %v1639, 7
      %v1641 = vsub.s32 0, %v1640
      %v1642 = vrot.slane %v1619, %v1641
      %v1644 = vmul.f32 %v1636, %v1642
      %v1645 = vmul.f32 %v1637, %v1642
      %v1646 = vld [vmem:[%s708] sm:$0xff]
      %v1647 = vld [vmem:[%s708 + $0x8] sm:$0xff]
      %v1648 = vld [vmem:[%s708 + $0x10] sm:$0xff]
      %v1649 = vld [vmem:[%s708 + $0x18] sm:$0xff]
      %v1650 = vld [vmem:[%s708 + $0x20] sm:$0xff]
      %v1651 = vld [vmem:[%s708 + $0x28] sm:$0xff]
      %v1652 = vld [vmem:[%s708 + $0x30] sm:$0xff]
      %v1653 = vld [vmem:[%s708 + $0x38] sm:$0xff]
      %v1654 = vpack.c.bf16 %v1645, %v1644
      %v1655 = vpack.c.bf16 %v1647, %v1646
      %v1656 = vpack.c.bf16 %v1649, %v1648
      %v1657 = vpack.c.bf16 %v1651, %v1650
      %v1658 = vpack.c.bf16 %v1653, %v1652
      %v1660 = vsel %vm848, %v1654, 0
      %1662 = vmatprep.subr.bf16.mxu0 0
      %1663 = vmatpush1.bf16.msra.mxu0 %v1655
      %1664 = vmatprep.subr.bf16.mxu0 0
      %1665 = vmatpush1.bf16.msra.mxu0 %v1656
      %1666 = vmatprep.subr.bf16.mxu0 0
      %1667 = vmatpush1.bf16.msra.mxu0 %v1657
      %1668 = vmatprep.subr.bf16.mxu0 0
      %1669 = vmatpush1.bf16.msra.mxu0 %v1658
      %1670 = vmatprep.subr.bf16.mxu0 0
      %1671 = vmatpush1.bf16.msra.mxu0 0
      %1672 = vmatprep.subr.bf16.mxu0 0
      %1673 = vmatpush1.bf16.msra.mxu0 0
      %1674 = vmatprep.subr.bf16.mxu0 0
      %1675 = vmatpush1.bf16.msra.mxu0 0
      %1676 = vmatprep.subr.bf16.mxu0 0
      %1677 = vmatpush1.bf16.msra.mxu0 0
      %1678 = vmatprep.subr.bf16.mxu0 0
      %1679 = vmatpush1.bf16.msra.mxu0 0
      %1680 = vmatprep.subr.bf16.mxu0 0
      %1681 = vmatpush1.bf16.msra.mxu0 0
      %1682 = vmatprep.subr.bf16.mxu0 0
      %1683 = vmatpush1.bf16.msra.mxu0 0
      %1684 = vmatprep.subr.bf16.mxu0 0
      %1685 = vmatpush1.bf16.msra.mxu0 0
      %1686 = vmatprep.subr.bf16.mxu0 0
      %1687 = vmatpush1.bf16.msra.mxu0 0
      %1688 = vmatprep.subr.bf16.mxu0 0
      %1689 = vmatpush1.bf16.msra.mxu0 0
      %1690 = vmatprep.subr.bf16.mxu0 0
      %1691 = vmatpush1.bf16.msra.mxu0 0
      %1692 = vmatprep.subr.bf16.mxu0 0
      %1693 = vmatpush1.bf16.msra.mxu0 0
      %1694 = vmatprep.mubr.bf16.mxu0 0
      %1695 = vmatmul.mubr.bf16.gmra.mrb[0].mxu0 %v1660
      %v1696 = vpop.f32.mrb[0].mxu0
      %v1697 = vadd.f32 0.0, %v1696
      %v1698 = vpop.f32.mrb[0].mxu0
      %v1699 = vpop.f32.mrb[0].mxu0
      %v1700 = vadd.f32 0.0, %v1699
      %v1701 = vpop.f32.mrb[0].mxu0
      %1702 = vdwg.mxu0
      %v1703 = vadd.f32 %v741, %v1697
      %v1704 = vadd.f32 %v742, %v1700
      %v1705 = vld [vmem:[%s679] sm:$0x1]
      %v1706 = vmul.f32 %v1703, %v1703
      %v1707 = vmul.f32 %v1704, %v1704
      %v1708 = vsel %vm746, %v1706, 0.0
      %1709 = vadd.xlane.f32.xlu0 %v1708
      %v1710 = vpop.xlane.xlu0 %1709
      %v1711 = vsel %vm750, %v1707, 0.0
      %1712 = vadd.xlane.f32.xlu0 %v1711
      %v1713 = vpop.xlane.xlu0 %1712
      %v1714 = vmul.f32 %v1710, %v754
      %v1715 = vmul.f32 %v1713, %v754
      %v1716 = vadd.f32 %v1714, 1e-06
      %v1717 = vadd.f32 %v1715, 1e-06
      %v1718 = vrsqrt.pop %v1716
      %v1719 = vrsqrt.pop %v1717
      %v1720 = vmul.f32 %v1703, %v1718
      %v1721 = vmul.f32 %v1704, %v1719
      %v1723 = vlaneseq
      %v1724 = vshrl.u32 %v1723, 7
      %v1725 = vsub.s32 0, %v1724
      %v1726 = vrot.slane %v1705, %v1725
      %v1728 = vmul.f32 %v1720, %v1726
      %v1729 = vmul.f32 %v1721, %v1726
      %v1730 = vld [vmem:[%s713] sm:$0xff]
      %v1731 = vld [vmem:[%s713 + $0x8] sm:$0xff]
      %v1732 = vld [vmem:[%s713 + $0x10] sm:$0xff]
      %v1733 = vld [vmem:[%s713 + $0x18] sm:$0xff]
      %v1734 = vld [vmem:[%s716] sm:$0x1]
      %v1735 = vpack.c.bf16 %v1729, %v1728
      %v1736 = vpack.c.bf16 %v1731, %v1730
      %v1737 = vpack.c.bf16 %v1733, %v1732
      %v1739 = vlaneseq
      %v1740 = vshrl.u32 %v1739, 7
      %v1741 = vsub.s32 0, %v1740
      %v1742 = vrot.slane %v1734, %v1741
      %v1745 = vsel %vm746, %v1735, 0
      %1747 = vmatprep.subr.bf16.mxu0 0
      %1748 = vmatpush1.bf16.msra.mxu0 %v1736
      %1749 = vmatprep.subr.bf16.mxu0 0
      %1750 = vmatpush1.bf16.msra.mxu0 %v1737
      %1751 = vmatprep.subr.bf16.mxu0 0
      %1752 = vmatpush1.bf16.msra.mxu0 0
      %1753 = vmatprep.subr.bf16.mxu0 0
      %1754 = vmatpush1.bf16.msra.mxu0 0
      %1755 = vmatprep.subr.bf16.mxu0 0
      %1756 = vmatpush1.bf16.msra.mxu0 0
      %1757 = vmatprep.subr.bf16.mxu0 0
      %1758 = vmatpush1.bf16.msra.mxu0 0
      %1759 = vmatprep.subr.bf16.mxu0 0
      %1760 = vmatpush1.bf16.msra.mxu0 0
      %1761 = vmatprep.subr.bf16.mxu0 0
      %1762 = vmatpush1.bf16.msra.mxu0 0
      %1763 = vmatprep.subr.bf16.mxu0 0
      %1764 = vmatpush1.bf16.msra.mxu0 0
      %1765 = vmatprep.subr.bf16.mxu0 0
      %1766 = vmatpush1.bf16.msra.mxu0 0
      %1767 = vmatprep.subr.bf16.mxu0 0
      %1768 = vmatpush1.bf16.msra.mxu0 0
      %1769 = vmatprep.subr.bf16.mxu0 0
      %1770 = vmatpush1.bf16.msra.mxu0 0
      %1771 = vmatprep.subr.bf16.mxu0 0
      %1772 = vmatpush1.bf16.msra.mxu0 0
      %1773 = vmatprep.subr.bf16.mxu0 0
      %1774 = vmatpush1.bf16.msra.mxu0 0
      %1775 = vmatprep.subr.bf16.mxu0 0
      %1776 = vmatpush1.bf16.msra.mxu0 0
      %1777 = vmatprep.subr.bf16.mxu0 0
      %1778 = vmatpush1.bf16.msra.mxu0 0
      %1779 = vmatprep.mubr.bf16.mxu0 0
      %1780 = vmatmul.mubr.bf16.gmra.mrb[0].mxu0 %v1745
      %v1781 = vpop.f32.mrb[0].mxu0
      %v1782 = vadd.f32 %v1742, %v1781
      %v1783 = vpop.f32.mrb[0].mxu0
      %v1784 = vpop.f32.mrb[0].mxu0
      %v1785 = vadd.f32 %v1742, %v1784
      %v1786 = vpop.f32.mrb[0].mxu0
      %1787 = vdwg.mxu0
      %v1788 = vxor.u32 %v1782, 2147483648
      %v1789 = vxor.u32 %v1785, 2147483648
      %v1790 = vmul.f32 %v1788, 1.442695
      %v1791 = vpow.pop %v1790
      %v1792 = vmul.f32 %v1789, 1.442695
      %v1793 = vpow.pop %v1792
      %v1794 = vadd.f32 %v1791, 1.0
      %v1795 = vadd.f32 %v1793, 1.0
      %v1796 = vrcp.pop %v1794
      %v1797 = vmul.f32 1.0, %v1796
      %v1798 = vrcp.pop %v1795
      %v1799 = vmul.f32 1.0, %v1798
      %v1800 = vmul.f32 %v1782, %v1797
      %v1801 = vmul.f32 %v1785, %v1799
      %v1802 = vld [vmem:[%s721] sm:$0xff]
      %v1803 = vld [vmem:[%s721 + $0x8] sm:$0xff]
      %v1804 = vld [vmem:[%s721 + $0x10] sm:$0xff]
      %v1805 = vld [vmem:[%s721 + $0x18] sm:$0xff]
      %v1806 = vld [vmem:[%s721 + $0x20] sm:$0xff]
      %v1807 = vld [vmem:[%s721 + $0x28] sm:$0xff]
      %v1808 = vld [vmem:[%s721 + $0x30] sm:$0xff]
      %v1809 = vld [vmem:[%s721 + $0x38] sm:$0xff]
      %v1810 = vld [vmem:[%s721 + $0x40] sm:$0xff]
      %v1811 = vld [vmem:[%s721 + $0x48] sm:$0xff]
      %v1812 = vld [vmem:[%s721 + $0x50] sm:$0xff]
      %v1813 = vld [vmem:[%s721 + $0x58] sm:$0xff]
      %v1814 = vld [vmem:[%s721 + $0x60] sm:$0xff]
      %v1815 = vld [vmem:[%s721 + $0x68] sm:$0xff]
      %v1816 = vld [vmem:[%s721 + $0x70] sm:$0xff]
      %v1817 = vld [vmem:[%s721 + $0x78] sm:$0xff]
      %v1818 = vld [vmem:[%s724] sm:$0x1]
      %v1819 = vpack.c.bf16 %v1801, %v1800
      %v1820 = vpack.c.bf16 %v1803, %v1802
      %v1821 = vpack.c.bf16 %v1805, %v1804
      %v1822 = vpack.c.bf16 %v1807, %v1806
      %v1823 = vpack.c.bf16 %v1809, %v1808
      %v1824 = vpack.c.bf16 %v1811, %v1810
      %v1825 = vpack.c.bf16 %v1813, %v1812
      %v1826 = vpack.c.bf16 %v1815, %v1814
      %v1827 = vpack.c.bf16 %v1817, %v1816
      %v1829 = vlaneseq
      %v1830 = vshrl.u32 %v1829, 7
      %v1831 = vsub.s32 0, %v1830
      %v1832 = vrot.slane %v1818, %v1831
      %1834 = vmatprep.subr.bf16.mxu0 0
      %1835 = vmatpush1.bf16.msra.mxu0 %v1820
      %1836 = vmatprep.subr.bf16.mxu0 0
      %1837 = vmatpush1.bf16.msra.mxu0 %v1821
      %1838 = vmatprep.subr.bf16.mxu0 0
      %1839 = vmatpush1.bf16.msra.mxu0 %v1822
      %1840 = vmatprep.subr.bf16.mxu0 0
      %1841 = vmatpush1.bf16.msra.mxu0 %v1823
      %1842 = vmatprep.subr.bf16.mxu0 0
      %1843 = vmatpush1.bf16.msra.mxu0 %v1824
      %1844 = vmatprep.subr.bf16.mxu0 0
      %1845 = vmatpush1.bf16.msra.mxu0 %v1825
      %1846 = vmatprep.subr.bf16.mxu0 0
      %1847 = vmatpush1.bf16.msra.mxu0 %v1826
      %1848 = vmatprep.subr.bf16.mxu0 0
      %1849 = vmatpush1.bf16.msra.mxu0 %v1827
      %1850 = vmatprep.subr.bf16.mxu0 0
      %1851 = vmatpush1.bf16.msra.mxu0 0
      %1852 = vmatprep.subr.bf16.mxu0 0
      %1853 = vmatpush1.bf16.msra.mxu0 0
      %1854 = vmatprep.subr.bf16.mxu0 0
      %1855 = vmatpush1.bf16.msra.mxu0 0
      %1856 = vmatprep.subr.bf16.mxu0 0
      %1857 = vmatpush1.bf16.msra.mxu0 0
      %1858 = vmatprep.subr.bf16.mxu0 0
      %1859 = vmatpush1.bf16.msra.mxu0 0
      %1860 = vmatprep.subr.bf16.mxu0 0
      %1861 = vmatpush1.bf16.msra.mxu0 0
      %1862 = vmatprep.subr.bf16.mxu0 0
      %1863 = vmatpush1.bf16.msra.mxu0 0
      %1864 = vmatprep.subr.bf16.mxu0 0
      %1865 = vmatpush1.bf16.msra.mxu0 0
      %1866 = vmatprep.mubr.bf16.mxu0 0
      %1867 = vmatmul.mubr.bf16.gmra.mrb[0].mxu0 %v1819
      %v1868 = vpop.f32.mrb[0].mxu0
      %v1869 = vadd.f32 %v1832, %v1868
      %v1870 = vpop.f32.mrb[0].mxu0
      %v1871 = vpop.f32.mrb[0].mxu0
      %v1872 = vadd.f32 %v1832, %v1871
      %v1873 = vpop.f32.mrb[0].mxu0
      %1874 = vdwg.mxu0
      %v1875 = vadd.f32 %v1703, %v1869
      %v1876 = vadd.f32 %v1704, %v1872
      %1877 = vst.msk [vmem:[%s729] sm:$0xff] %vm746, %v1875
      %1878 = vst.msk [vmem:[%s729 + $0x8] sm:$0x1] %vm750, %v1876
      %p1879 = scmp.lt.s32.totalorder %s30, 1
      %s1880 = scalar_select %p1879, %s30, 1
      %s1881 = smul.addr %s1880, 2
      %s1882 = smul.addr %s1881, 8
      %s1883 = scalar_lea.vmem %s15, %s1882
      // Predicated region
      $region85: #{tpu_custom_call.1} parent=79 // pred_check
        %p1884 = pneg %p446
      $region86: #{tpu_custom_call.1} parent=79 // pred_check_branch
        %1886 = sbr.rel (%p1884) target = $region88
      $region87: #{tpu_custom_call.1} parent=79 // pred_region
        _
      $region88: #{tpu_custom_call.1} parent=79 // pred_fallthru
        _
    $region80: #{tpu_custom_call.1} parent=5 // pred_fallthru
      _
    %p1887 = scmp.le.s32.totalorder 2, %s21
    // Predicated region
    $region89: #{tpu_custom_call.1} parent=5 // pred_check
      %p1888 = pneg %p1887
    $region90: #{tpu_custom_call.1} parent=5 // pred_check_branch
      %1890 = sbr.rel (%p1888) target = $region92
    $region91: #{tpu_custom_call.1} parent=5 // pred_region
      %s1891 = ssub.s32 %s21, 2
      // Predicated region
      $region93: #{tpu_custom_call.1} parent=91 // pred_check
        %p1892 = pneg %p452
      $region94: #{tpu_custom_call.1} parent=91 // pred_check_branch
        %1894 = sbr.rel (%p1892) target = $region96
      $region95: #{tpu_custom_call.1} parent=91 // pred_region
        %p1895 = scmp.lt.s32.totalorder %s32, 1
        %s1896 = scalar_select %p1895, %s32, 1
        %s1897 = smul.addr %s1896, 2
        %s1898 = smul.addr %s1897, 8
        %s1899 = scalar_lea.vmem %s15, %s1898
      $region96: #{tpu_custom_call.1} parent=91 // pred_fallthru
        _
    $region92: #{tpu_custom_call.1} parent=5 // pred_fallthru
      _
  $region6: #{tpu_custom_call.1} parent=0 // loop_footer
    %s25 = sadd.s32 1, %s21
  $region7: #{tpu_custom_call.1} parent=0 // loop_footer_branch
    %20 = sbr.rel target = $region3
  $region8: #{tpu_custom_call.1} parent=0 // loop_exit
    _

</llo_original>
